<compile_context>
chip_gen: v7x
topology: tpu7x:2x2x1
jax: 0.10.0
libtpu: 0.0.40
codegen_flags: <defaults>
</compile_context>

<pallas_src>
import jax
import jax.numpy as jnp
from jax.experimental import pallas as pl
from jax.experimental.pallas import tpu as pltpu

IN_FEATURES = 128 * 5 * 5     # 3200
HIDDEN = 256
NUM_CLASSES = 10
PAD_CLASSES = 128             # lane-dense output; sliced to NUM_CLASSES outside
BN_EPS = 1e-5


def gc_kernel(x_ref, w1_ref, gamma_ref, beta_ref, w2_ref, b2_ref, o_ref):
    # ---- Linear(3200 -> 256): bf16 MXU matmul, f32 accumulation ----
    # x is cast to bf16 here (saves a separate wrapper-side XLA cast dispatch).
    # b1 omitted: training-mode BN subtracts the batch mean right after.
    x = x_ref[...].astype(jnp.bfloat16)
    h = jnp.dot(x, w1_ref[...], preferred_element_type=jnp.float32)   # (B, 256)

    # ---- BatchNorm1d (training mode) fused into per-feature scale/shift ----
    mean = jnp.mean(h, axis=0, keepdims=True)                          # (1, 256)
    centered = h - mean
    var = jnp.mean(centered * centered, axis=0, keepdims=True)         # biased var
    scale = gamma_ref[...] * jax.lax.rsqrt(var + BN_EPS)               # EUP rsqrt
    shift = beta_ref[...] - mean * scale
    h = jnp.maximum(h * scale + shift, 0.0)                            # BN + ReLU

    # ---- Linear(256 -> 10) on the bf16 MXU path, lane-padded to 128 ----
    logits = jnp.dot(h.astype(jnp.bfloat16), w2_ref[...],
                     preferred_element_type=jnp.float32) + b2_ref[...]
    o_ref[...] = logits.astype(o_ref.dtype)                            # dense vst


def gc_forward(features, w1, gamma, beta, w2p, b2p):
    """features: (B, 3200) f32; w1: (3200, 256) bf16; gamma/beta: (1, 256) f32;
    w2p: (256, PAD_CLASSES) bf16 (pre-padded); b2p: (1, PAD_CLASSES) f32.
    Returns (B, NUM_CLASSES) f32 logits.
    """
    B = features.shape[0]
    vmem = pl.BlockSpec(memory_space=pltpu.MemorySpace.VMEM)

    padded = pl.pallas_call(
        gc_kernel,
        out_shape=jax.ShapeDtypeStruct((B, PAD_CLASSES), jnp.float32),
        in_specs=[vmem] * 6,      # whole arrays resident in VMEM, no grid loop
        out_specs=vmem,
    )(features, w1, gamma, beta, w2p, b2p)

    return padded[:, :NUM_CLASSES]


def init_params(key):
    """Deterministic init mirroring the PyTorch module, pre-laid-out for the
    kernel (no per-call pads/casts in the forward path).

    init_paras only touches Conv2d / BatchNorm; the Linear layers keep
    PyTorch's default uniform(-1/sqrt(fan_in), 1/sqrt(fan_in)) init, and the
    BatchNorm1d gets weight=1, bias=0.  W1/W2 are stored bf16; W2/b2 are
    lane-padded to PAD_CLASSES; b1 is not materialized (BN cancels it).
    """
    k1, k2, k3 = jax.random.split(key, 3)
    bound1 = 1.0 / (IN_FEATURES ** 0.5)
    w1 = jax.random.uniform(
        k1, (IN_FEATURES, HIDDEN), jnp.float32, -bound1, bound1
    ).astype(jnp.bfloat16)
    gamma = jnp.ones((1, HIDDEN), jnp.float32)
    beta = jnp.zeros((1, HIDDEN), jnp.float32)
    bound2 = 1.0 / (HIDDEN ** 0.5)
    w2 = jax.random.uniform(k2, (HIDDEN, NUM_CLASSES), jnp.float32, -bound2, bound2)
    b2 = jax.random.uniform(k3, (1, NUM_CLASSES), jnp.float32, -bound2, bound2)
    w2p = jnp.pad(w2, ((0, 0), (0, PAD_CLASSES - NUM_CLASSES))).astype(jnp.bfloat16)
    b2p = jnp.pad(b2, ((0, 0), (0, PAD_CLASSES - NUM_CLASSES)))
    return w1, gamma, beta, w2p, b2p


def gc_reference(features, w1, gamma, beta, w2p, b2p):
    """Pure-JAX reference applying the same bf16 operand casts as the kernel."""
    x = features.astype(jnp.bfloat16).astype(jnp.float32)
    w1f = w1.astype(jnp.float32)
    h = x @ w1f
    mean = jnp.mean(h, axis=0, keepdims=True)
    var = jnp.mean((h - mean) ** 2, axis=0, keepdims=True)
    h = (h - mean) * jax.lax.rsqrt(var + BN_EPS) * gamma + beta
    h = jnp.maximum(h, 0.0)
    logits = (h.astype(jnp.bfloat16).astype(jnp.float32)
              @ w2p.astype(jnp.float32) + b2p)
    return logits[:, :NUM_CLASSES]


if __name__ == "__main__":
    key = jax.random.PRNGKey(0)
    pkey, xkey = jax.random.split(key)
    params = init_params(pkey)

    B = 4  # small batch; training-mode BatchNorm stats are over this batch
    features = jax.random.normal(xkey, (B, IN_FEATURES), jnp.float32)

    out = gc_forward(features, *params)
    jax.block_until_ready(out)
    assert out.shape == (B, NUM_CLASSES), out.shape

    ref = gc_reference(features, *params)
    assert jnp.allclose(out, ref, atol=2e-2, rtol=2e-2), (
        float(jnp.max(jnp.abs(out - ref))))

    print("KERNEL_OK")
</pallas_src>

<mosaic_0001>
module attributes {stable_mosaic.version = 11 : i64} {
  func.func @gc_kernel(%arg0: memref<4x3200xf32, #tpu.memory_space<vmem>>, %arg1: memref<3200x256xbf16, #tpu.memory_space<vmem>>, %arg2: memref<1x256xf32, #tpu.memory_space<vmem>>, %arg3: memref<1x256xf32, #tpu.memory_space<vmem>>, %arg4: memref<256x128xbf16, #tpu.memory_space<vmem>>, %arg5: memref<1x128xf32, #tpu.memory_space<vmem>>, %arg6: memref<4x128xf32, #tpu.memory_space<vmem>>) attributes {dimension_semantics = [], scalar_prefetch = 0 : i64, scratch_operands = 0 : i64, tpu.core_type = #tpu.core_type<tc>} {
    %c0 = arith.constant 0 : index
    %c0_0 = arith.constant 0 : index
    %0 = vector.load %arg0[%c0, %c0_0] : memref<4x3200xf32, #tpu.memory_space<vmem>>, vector<4x3200xf32>
    %1 = arith.truncf %0 : vector<4x3200xf32> to vector<4x3200xbf16>
    %c0_1 = arith.constant 0 : index
    %c0_2 = arith.constant 0 : index
    %2 = vector.load %arg1[%c0_1, %c0_2] : memref<3200x256xbf16, #tpu.memory_space<vmem>>, vector<3200x256xbf16>
    %cst = arith.constant dense<0.000000e+00> : vector<4x256xf32>
    %3 = tpu.matmul %1, %2, %cst {dimension_numbers = #tpu.dot_dimension_numbers<[1], [0], [0], [1], [0, 0, 1, 1], [], []>} : vector<4x3200xbf16>, vector<3200x256xbf16>, vector<4x256xf32> -> vector<4x256xf32>
    %cst_3 = arith.constant dense<0.000000e+00> : vector<256xf32>
    %4 = vector.multi_reduction <add>, %3, %cst_3 [0] : vector<4x256xf32> to vector<256xf32>
    %5 = vector.shape_cast %4 : vector<256xf32> to vector<1x256xf32>
    %cst_4 = arith.constant 4.000000e+00 : f32
    %6 = vector.broadcast %cst_4 : f32 to vector<1x256xf32>
    %7 = arith.divf %5, %6 : vector<1x256xf32>
    %8 = vector.broadcast %7 : vector<1x256xf32> to vector<4x256xf32>
    %9 = arith.subf %3, %8 : vector<4x256xf32>
    %10 = arith.mulf %9, %9 : vector<4x256xf32>
    %cst_5 = arith.constant dense<0.000000e+00> : vector<256xf32>
    %11 = vector.multi_reduction <add>, %10, %cst_5 [0] : vector<4x256xf32> to vector<256xf32>
    %12 = vector.shape_cast %11 : vector<256xf32> to vector<1x256xf32>
    %cst_6 = arith.constant 4.000000e+00 : f32
    %13 = vector.broadcast %cst_6 : f32 to vector<1x256xf32>
    %14 = arith.divf %12, %13 : vector<1x256xf32>
    %c0_7 = arith.constant 0 : index
    %c0_8 = arith.constant 0 : index
    %15 = vector.load %arg2[%c0_7, %c0_8] : memref<1x256xf32, #tpu.memory_space<vmem>>, vector<1x256xf32>
    %cst_9 = arith.constant 9.99999974E-6 : f32
    %16 = vector.broadcast %cst_9 : f32 to vector<1x256xf32>
    %17 = arith.addf %14, %16 : vector<1x256xf32>
    %18 = math.rsqrt %17 : vector<1x256xf32>
    %19 = arith.mulf %15, %18 : vector<1x256xf32>
    %c0_10 = arith.constant 0 : index
    %c0_11 = arith.constant 0 : index
    %20 = vector.load %arg3[%c0_10, %c0_11] : memref<1x256xf32, #tpu.memory_space<vmem>>, vector<1x256xf32>
    %21 = arith.mulf %7, %19 : vector<1x256xf32>
    %22 = arith.subf %20, %21 : vector<1x256xf32>
    %23 = vector.broadcast %19 : vector<1x256xf32> to vector<4x256xf32>
    %24 = arith.mulf %3, %23 : vector<4x256xf32>
    %25 = vector.broadcast %22 : vector<1x256xf32> to vector<4x256xf32>
    %26 = arith.addf %24, %25 : vector<4x256xf32>
    %cst_12 = arith.constant 0.000000e+00 : f32
    %27 = vector.broadcast %cst_12 : f32 to vector<4x256xf32>
    %28 = arith.maximumf %26, %27 : vector<4x256xf32>
    %29 = arith.truncf %28 : vector<4x256xf32> to vector<4x256xbf16>
    %c0_13 = arith.constant 0 : index
    %c0_14 = arith.constant 0 : index
    %30 = vector.load %arg4[%c0_13, %c0_14] : memref<256x128xbf16, #tpu.memory_space<vmem>>, vector<256x128xbf16>
    %cst_15 = arith.constant dense<0.000000e+00> : vector<4x128xf32>
    %31 = tpu.matmul %29, %30, %cst_15 {dimension_numbers = #tpu.dot_dimension_numbers<[1], [0], [0], [1], [0, 0, 1, 1], [], []>} : vector<4x256xbf16>, vector<256x128xbf16>, vector<4x128xf32> -> vector<4x128xf32>
    %c0_16 = arith.constant 0 : index
    %c0_17 = arith.constant 0 : index
    %32 = vector.load %arg5[%c0_16, %c0_17] : memref<1x128xf32, #tpu.memory_space<vmem>>, vector<1x128xf32>
    %33 = vector.broadcast %32 : vector<1x128xf32> to vector<4x128xf32>
    %34 = arith.addf %31, %33 : vector<4x128xf32>
    %c0_18 = arith.constant 0 : index
    %c0_19 = arith.constant 0 : index
    %35 = vector.load %arg6[%c0_18, %c0_19] : memref<4x128xf32, #tpu.memory_space<vmem>>, vector<4x128xf32>
    tpu.vector_store %arg6[%c0_18, %c0_19], %34 {strides = array<i32>} : memref<4x128xf32, #tpu.memory_space<vmem>>, vector<4x128xf32>,
    return
  }
}

</mosaic_0001>

<llo_original>
// kernel: tpu_custom_call.1
$region0: #{tpu_custom_call.1}
  #allocation0 [shape = 'u32[]', space=smem, size = 0x4, offset = 0x4, fixed_abs, tag = 'smem constant byte address 0x4 - core index']
  #allocation1 [shape = 'u32[144,128]{1,0:T(1,128)}', space=vmem, size = 0x12000, scoped, tag = 'internal scratch']
  %s0 = inlined_call_operand.hbm [shape: f32[4,3200], index: 0, kind: input, shape index: {}]
  %s1 = inlined_call_operand.hbm [shape: bf16[3200,256], index: 1, kind: input, shape index: {}]
  %s2 = inlined_call_operand.hbm [shape: f32[1,256], index: 2, kind: input, shape index: {}]
  %s3 = inlined_call_operand.hbm [shape: f32[1,256], index: 3, kind: input, shape index: {}]
  %s4 = inlined_call_operand.hbm [shape: bf16[256,128], index: 4, kind: input, shape index: {}]
  %s5 = inlined_call_operand.hbm [shape: f32[1,128], index: 5, kind: input, shape index: {}]
  %s6 = inlined_call_operand.hbm [shape: f32[4,128], index: 6, kind: output, shape index: {}]
  %s7 = sld [smem:[#allocation0]]
  $region58: #{tpu_custom_call.1} parent=0
    _
  %s9 = ssub.s32 1, %s7
  %s10 = scalar_select 0, %s9, %s7
  $region1: #{tpu_custom_call.1} parent=0
    #allocation2 [shape = 'u8[51200]{0}', space=vmem, size = 0xc800, scoped, tag = 'input window, operand 0, single buffered']
    #allocation3 [shape = 's32[1]{0}', space=sflag, size = 0x4, scoped, tag = 'scoped memory for tpu_custom_call.1']
    #allocation4 [shape = 's32[1]{0}', space=sflag, size = 0x4, scoped, tag = 'scoped memory for tpu_custom_call.1']
    #allocation5 [shape = 'u8[1638400]{0}', space=vmem, size = 0x190000, scoped, tag = 'input window, operand 1, single buffered']
    #allocation6 [shape = 's32[1]{0}', space=sflag, size = 0x4, scoped, tag = 'scoped memory for tpu_custom_call.1']
    #allocation7 [shape = 'u8[1024]{0}', space=vmem, size = 0x400, scoped, tag = 'input window, operand 2, single buffered']
    #allocation8 [shape = 'u8[1024]{0}', space=vmem, size = 0x400, scoped, tag = 'input window, operand 3, single buffered']
    #allocation9 [shape = 's32[1]{0}', space=sflag, size = 0x4, scoped, tag = 'scoped memory for tpu_custom_call.1']
    #allocation10 [shape = 'u8[65536]{0}', space=vmem, size = 0x10000, scoped, tag = 'input window, operand 4, single buffered']
    #allocation11 [shape = 'u8[512]{0}', space=vmem, size = 0x400, scoped, tag = 'input window, operand 5, single buffered']
    #allocation12 [shape = 's32[1]{0}', space=sflag, size = 0x4, scoped, tag = 'scoped memory for tpu_custom_call.1']
    #allocation13 [shape = 'u8[2048]{0}', space=vmem, size = 0x800, scoped, tag = 'output window, operand 0, single buffered']
    %11 = vsyncpa [#allocation3], 0
    %12 = vsyncpa [#allocation6], 0
    %13 = vsyncpa [#allocation9], 0
    %14 = vsyncpa [#allocation12], 0
    %15 = vsyncpa [#allocation4], 0
    // Predicated region
    $region2: #{tpu_custom_call.1} parent=1 // pred_check
      _
    $region3: #{tpu_custom_call.1} parent=1 // pred_check_branch
      %17 = sbr.rel (0) target = $region5
    $region4: #{tpu_custom_call.1} parent=1 // pred_region
      %s19 = ssub.s32 1600, 1600
      %20 = vsyncadd [#allocation3], %s19
      %s22 = sshll.u32 [#allocation2], 4
      %s23 = int_to_ptr.vmem [resolvable:$true] %s22
      %25 = dma.hbm_to_vmem [thread:$0]  %s0, 1600, %s23, [#allocation3]
    $region5: #{tpu_custom_call.1} parent=1 // pred_fallthru
      _
    // Predicated region
    $region6: #{tpu_custom_call.1} parent=1 // pred_check
      _
    $region7: #{tpu_custom_call.1} parent=1 // pred_check_branch
      %27 = sbr.rel (0) target = $region9
    $region8: #{tpu_custom_call.1} parent=1 // pred_region
      %s29 = ssub.s32 51200, 51200
      %30 = vsyncadd [#allocation6], %s29
      %s31 = sshll.u32 [#allocation5], 4
      %s32 = int_to_ptr.vmem [resolvable:$true] %s31
      %37 = dma.hbm_to_vmem [thread:$0]  %s1, 51200, %s32, [#allocation6], 128, 128, 8
    $region9: #{tpu_custom_call.1} parent=1 // pred_fallthru
      _
    // Predicated region
    $region10: #{tpu_custom_call.1} parent=1 // pred_check
      _
    $region11: #{tpu_custom_call.1} parent=1 // pred_check_branch
      %39 = sbr.rel (0) target = $region13
    $region12: #{tpu_custom_call.1} parent=1 // pred_region
      %s41 = ssub.s32 32, 32
      %42 = vsyncadd [#allocation6], %s41
      %s44 = sshll.u32 [#allocation7], 4
      %s45 = int_to_ptr.vmem [resolvable:$true] %s44
      %47 = dma.hbm_to_vmem [thread:$0]  %s2, 32, %s45, [#allocation6]
    $region13: #{tpu_custom_call.1} parent=1 // pred_fallthru
      _
    // Predicated region
    $region14: #{tpu_custom_call.1} parent=1 // pred_check
      _
    $region15: #{tpu_custom_call.1} parent=1 // pred_check_branch
      %49 = sbr.rel (0) target = $region17
    $region16: #{tpu_custom_call.1} parent=1 // pred_region
      %s51 = ssub.s32 32, 32
      %52 = vsyncadd [#allocation9], %s51
      %s54 = sshll.u32 [#allocation8], 4
      %s55 = int_to_ptr.vmem [resolvable:$true] %s54
      %57 = dma.hbm_to_vmem [thread:$0]  %s3, 32, %s55, [#allocation9]
    $region17: #{tpu_custom_call.1} parent=1 // pred_fallthru
      _
    // Predicated region
    $region18: #{tpu_custom_call.1} parent=1 // pred_check
      _
    $region19: #{tpu_custom_call.1} parent=1 // pred_check_branch
      %59 = sbr.rel (0) target = $region21
    $region20: #{tpu_custom_call.1} parent=1 // pred_region
      %s61 = ssub.s32 2048, 2048
      %62 = vsyncadd [#allocation9], %s61
      %s63 = sshll.u32 [#allocation10], 4
      %s64 = int_to_ptr.vmem [resolvable:$true] %s63
      %69 = dma.hbm_to_vmem [thread:$0]  %s4, 2048, %s64, [#allocation9], 64, 64, 4
    $region21: #{tpu_custom_call.1} parent=1 // pred_fallthru
      _
    // Predicated region
    $region22: #{tpu_custom_call.1} parent=1 // pred_check
      _
    $region23: #{tpu_custom_call.1} parent=1 // pred_check_branch
      %71 = sbr.rel (0) target = $region25
    $region24: #{tpu_custom_call.1} parent=1 // pred_region
      %s73 = ssub.s32 16, 16
      %74 = vsyncadd [#allocation12], %s73
      %s76 = sshll.u32 [#allocation11], 4
      %s77 = int_to_ptr.vmem [resolvable:$true] %s76
      %79 = dma.hbm_to_vmem [thread:$0]  %s5, 16, %s77, [#allocation12]
    $region25: #{tpu_custom_call.1} parent=1 // pred_fallthru
      _
    // Predicated region
    $region26: #{tpu_custom_call.1} parent=1 // pred_check
      _
    $region27: #{tpu_custom_call.1} parent=1 // pred_check_branch
      %81 = sbr.rel (0) target = $region29
    $region28: #{tpu_custom_call.1} parent=1 // pred_region
      %82 = dma.done [#allocation3], 1600
    $region29: #{tpu_custom_call.1} parent=1 // pred_fallthru
      _
    // Predicated region
    $region30: #{tpu_custom_call.1} parent=1 // pred_check
      _
    $region31: #{tpu_custom_call.1} parent=1 // pred_check_branch
      %84 = sbr.rel (0) target = $region33
    $region32: #{tpu_custom_call.1} parent=1 // pred_region
      %85 = dma.done [#allocation6], 51200
    $region33: #{tpu_custom_call.1} parent=1 // pred_fallthru
      _
    // Predicated region
    $region34: #{tpu_custom_call.1} parent=1 // pred_check
      _
    $region35: #{tpu_custom_call.1} parent=1 // pred_check_branch
      %87 = sbr.rel (0) target = $region37
    $region36: #{tpu_custom_call.1} parent=1 // pred_region
      %88 = dma.done [#allocation6], 32
    $region37: #{tpu_custom_call.1} parent=1 // pred_fallthru
      _
    // Predicated region
    $region38: #{tpu_custom_call.1} parent=1 // pred_check
      _
    $region39: #{tpu_custom_call.1} parent=1 // pred_check_branch
      %90 = sbr.rel (0) target = $region41
    $region40: #{tpu_custom_call.1} parent=1 // pred_region
      %91 = dma.done [#allocation9], 32
    $region41: #{tpu_custom_call.1} parent=1 // pred_fallthru
      _
    // Predicated region
    $region42: #{tpu_custom_call.1} parent=1 // pred_check
      _
    $region43: #{tpu_custom_call.1} parent=1 // pred_check_branch
      %93 = sbr.rel (0) target = $region45
    $region44: #{tpu_custom_call.1} parent=1 // pred_region
      %94 = dma.done [#allocation9], 2048
    $region45: #{tpu_custom_call.1} parent=1 // pred_fallthru
      _
    // Predicated region
    $region46: #{tpu_custom_call.1} parent=1 // pred_check
      _
    $region47: #{tpu_custom_call.1} parent=1 // pred_check_branch
      %96 = sbr.rel (0) target = $region49
    $region48: #{tpu_custom_call.1} parent=1 // pred_region
      %97 = dma.done [#allocation12], 16
    $region49: #{tpu_custom_call.1} parent=1 // pred_fallthru
      _
    %v99 = vld [vmem:[#allocation2] sm:$0xff]
    %v100 = vld [vmem:[#allocation2 + $0x8] sm:$0xff]
    %v101 = vld [vmem:[#allocation2 + $0x10] sm:$0xff]
    %v102 = vld [vmem:[#allocation2 + $0x18] sm:$0xff]
    %v103 = vld [vmem:[#allocation2 + $0x20] sm:$0xff]
    %v104 = vld [vmem:[#allocation2 + $0x28] sm:$0xff]
    %v105 = vld [vmem:[#allocation2 + $0x30] sm:$0xff]
    %v106 = vld [vmem:[#allocation2 + $0x38] sm:$0xff]
    %v107 = vld [vmem:[#allocation2 + $0x40] sm:$0xff]
    %v108 = vld [vmem:[#allocation2 + $0x48] sm:$0xff]
    %v109 = vld [vmem:[#allocation2 + $0x50] sm:$0xff]
    %v110 = vld [vmem:[#allocation2 + $0x58] sm:$0xff]
    %v111 = vld [vmem:[#allocation2 + $0x60] sm:$0xf]
    %v124 = vcombine.high %v99, %v99
    %v125 = vcombine.high %v100, %v100
    %v126 = vcombine.high %v101, %v101
    %v127 = vcombine.high %v102, %v102
    %v128 = vcombine.high %v103, %v103
    %v129 = vcombine.high %v104, %v104
    %v130 = vcombine.high %v105, %v105
    %v131 = vcombine.high %v106, %v106
    %v132 = vcombine.high %v107, %v107
    %v133 = vcombine.high %v108, %v108
    %v134 = vcombine.high %v109, %v109
    %v135 = vcombine.high %v110, %v110
    %v148 = vpack.c.bf16 %v99, %v99
    %v149 = vpack.c.bf16 %v124, %v124
    %v150 = vpack.c.bf16 %v100, %v100
    %v151 = vpack.c.bf16 %v125, %v125
    %v152 = vpack.c.bf16 %v101, %v101
    %v153 = vpack.c.bf16 %v126, %v126
    %v154 = vpack.c.bf16 %v102, %v102
    %v155 = vpack.c.bf16 %v127, %v127
    %v156 = vpack.c.bf16 %v103, %v103
    %v157 = vpack.c.bf16 %v128, %v128
    %v158 = vpack.c.bf16 %v104, %v104
    %v159 = vpack.c.bf16 %v129, %v129
    %v160 = vpack.c.bf16 %v105, %v105
    %v161 = vpack.c.bf16 %v130, %v130
    %v162 = vpack.c.bf16 %v106, %v106
    %v163 = vpack.c.bf16 %v131, %v131
    %v164 = vpack.c.bf16 %v107, %v107
    %v165 = vpack.c.bf16 %v132, %v132
    %v166 = vpack.c.bf16 %v108, %v108
    %v167 = vpack.c.bf16 %v133, %v133
    %v168 = vpack.c.bf16 %v109, %v109
    %v169 = vpack.c.bf16 %v134, %v134
    %v170 = vpack.c.bf16 %v110, %v110
    %v171 = vpack.c.bf16 %v135, %v135
    %v172 = vpack.c.bf16 %v111, %v111
    %v173 = vld [vmem:[#allocation5] sm:$0xff]
    %v174 = vld [vmem:[#allocation5 + $0x8] sm:$0xff]
    %v175 = vld [vmem:[#allocation5 + $0x10] sm:$0xff]
    %v176 = vld [vmem:[#allocation5 + $0x18] sm:$0xff]
    %v177 = vld [vmem:[#allocation5 + $0x20] sm:$0xff]
    %v178 = vld [vmem:[#allocation5 + $0x28] sm:$0xff]
    %v179 = vld [vmem:[#allocation5 + $0x30] sm:$0xff]
    %v180 = vld [vmem:[#allocation5 + $0x38] sm:$0xff]
    %v181 = vld [vmem:[#allocation5 + $0x40] sm:$0xff]
    %v182 = vld [vmem:[#allocation5 + $0x48] sm:$0xff]
    %v183 = vld [vmem:[#allocation5 + $0x50] sm:$0xff]
    %v184 = vld [vmem:[#allocation5 + $0x58] sm:$0xff]
    %v185 = vld [vmem:[#allocation5 + $0x60] sm:$0xff]
    %v186 = vld [vmem:[#allocation5 + $0x68] sm:$0xff]
    %v187 = vld [vmem:[#allocation5 + $0x70] sm:$0xff]
    %v188 = vld [vmem:[#allocation5 + $0x78] sm:$0xff]
    %v189 = vld [vmem:[#allocation5 + $0x80] sm:$0xff]
    %v190 = vld [vmem:[#allocation5 + $0x88] sm:$0xff]
    %v191 = vld [vmem:[#allocation5 + $0x90] sm:$0xff]
    %v192 = vld [vmem:[#allocation5 + $0x98] sm:$0xff]
    %v193 = vld [vmem:[#allocation5 + $0xa0] sm:$0xff]
    %v194 = vld [vmem:[#allocation5 + $0xa8] sm:$0xff]
    %v195 = vld [vmem:[#allocation5 + $0xb0] sm:$0xff]
    %v196 = vld [vmem:[#allocation5 + $0xb8] sm:$0xff]
    %v197 = vld [vmem:[#allocation5 + $0xc0] sm:$0xff]
    %v198 = vld [vmem:[#allocation5 + $0xc8] sm:$0xff]
    %v199 = vld [vmem:[#allocation5 + $0xd0] sm:$0xff]
    %v200 = vld [vmem:[#allocation5 + $0xd8] sm:$0xff]
    %v201 = vld [vmem:[#allocation5 + $0xe0] sm:$0xff]
    %v202 = vld [vmem:[#allocation5 + $0xe8] sm:$0xff]
    %v203 = vld [vmem:[#allocation5 + $0xf0] sm:$0xff]
    %v204 = vld [vmem:[#allocation5 + $0xf8] sm:$0xff]
    %v205 = vld [vmem:[#allocation5 + $0x100] sm:$0xff]
    %v206 = vld [vmem:[#allocation5 + $0x108] sm:$0xff]
    %v207 = vld [vmem:[#allocation5 + $0x110] sm:$0xff]
    %v208 = vld [vmem:[#allocation5 + $0x118] sm:$0xff]
    %v209 = vld [vmem:[#allocation5 + $0x120] sm:$0xff]
    %v210 = vld [vmem:[#allocation5 + $0x128] sm:$0xff]
    %v211 = vld [vmem:[#allocation5 + $0x130] sm:$0xff]
    %v212 = vld [vmem:[#allocation5 + $0x138] sm:$0xff]
    %v213 = vld [vmem:[#allocation5 + $0x140] sm:$0xff]
    %v214 = vld [vmem:[#allocation5 + $0x148] sm:$0xff]
    %v215 = vld [vmem:[#allocation5 + $0x150] sm:$0xff]
    %v216 = vld [vmem:[#allocation5 + $0x158] sm:$0xff]
    %v217 = vld [vmem:[#allocation5 + $0x160] sm:$0xff]
    %v218 = vld [vmem:[#allocation5 + $0x168] sm:$0xff]
    %v219 = vld [vmem:[#allocation5 + $0x170] sm:$0xff]
    %v220 = vld [vmem:[#allocation5 + $0x178] sm:$0xff]
    %v221 = vld [vmem:[#allocation5 + $0x180] sm:$0xff]
    %v222 = vld [vmem:[#allocation5 + $0x188] sm:$0xff]
    %v223 = vld [vmem:[#allocation5 + $0x190] sm:$0xff]
    %v224 = vld [vmem:[#allocation5 + $0x198] sm:$0xff]
    %v225 = vld [vmem:[#allocation5 + $0x1a0] sm:$0xff]
    %v226 = vld [vmem:[#allocation5 + $0x1a8] sm:$0xff]
    %v227 = vld [vmem:[#allocation5 + $0x1b0] sm:$0xff]
    %v228 = vld [vmem:[#allocation5 + $0x1b8] sm:$0xff]
    %v229 = vld [vmem:[#allocation5 + $0x1c0] sm:$0xff]
    %v230 = vld [vmem:[#allocation5 + $0x1c8] sm:$0xff]
    %v231 = vld [vmem:[#allocation5 + $0x1d0] sm:$0xff]
    %v232 = vld [vmem:[#allocation5 + $0x1d8] sm:$0xff]
    %v233 = vld [vmem:[#allocation5 + $0x1e0] sm:$0xff]
    %v234 = vld [vmem:[#allocation5 + $0x1e8] sm:$0xff]
    %v235 = vld [vmem:[#allocation5 + $0x1f0] sm:$0xff]
    %v236 = vld [vmem:[#allocation5 + $0x1f8] sm:$0xff]
    %v237 = vld [vmem:[#allocation5 + $0x200] sm:$0xff]
    %v238 = vld [vmem:[#allocation5 + $0x208] sm:$0xff]
    %v239 = vld [vmem:[#allocation5 + $0x210] sm:$0xff]
    %v240 = vld [vmem:[#allocation5 + $0x218] sm:$0xff]
    %v241 = vld [vmem:[#allocation5 + $0x220] sm:$0xff]
    %v242 = vld [vmem:[#allocation5 + $0x228] sm:$0xff]
    %v243 = vld [vmem:[#allocation5 + $0x230] sm:$0xff]
    %v244 = vld [vmem:[#allocation5 + $0x238] sm:$0xff]
    %v245 = vld [vmem:[#allocation5 + $0x240] sm:$0xff]
    %v246 = vld [vmem:[#allocation5 + $0x248] sm:$0xff]
    %v247 = vld [vmem:[#allocation5 + $0x250] sm:$0xff]
    %v248 = vld [vmem:[#allocation5 + $0x258] sm:$0xff]
    %v249 = vld [vmem:[#allocation5 + $0x260] sm:$0xff]
    %v250 = vld [vmem:[#allocation5 + $0x268] sm:$0xff]
    %v251 = vld [vmem:[#allocation5 + $0x270] sm:$0xff]
    %v252 = vld [vmem:[#allocation5 + $0x278] sm:$0xff]
    %v253 = vld [vmem:[#allocation5 + $0x280] sm:$0xff]
    %v254 = vld [vmem:[#allocation5 + $0x288] sm:$0xff]
    %v255 = vld [vmem:[#allocation5 + $0x290] sm:$0xff]
    %v256 = vld [vmem:[#allocation5 + $0x298] sm:$0xff]
    %v257 = vld [vmem:[#allocation5 + $0x2a0] sm:$0xff]
    %v258 = vld [vmem:[#allocation5 + $0x2a8] sm:$0xff]
    %v259 = vld [vmem:[#allocation5 + $0x2b0] sm:$0xff]
    %v260 = vld [vmem:[#allocation5 + $0x2b8] sm:$0xff]
    %v261 = vld [vmem:[#allocation5 + $0x2c0] sm:$0xff]
    %v262 = vld [vmem:[#allocation5 + $0x2c8] sm:$0xff]
    %v263 = vld [vmem:[#allocation5 + $0x2d0] sm:$0xff]
    %v264 = vld [vmem:[#allocation5 + $0x2d8] sm:$0xff]
    %v265 = vld [vmem:[#allocation5 + $0x2e0] sm:$0xff]
    %v266 = vld [vmem:[#allocation5 + $0x2e8] sm:$0xff]
    %v267 = vld [vmem:[#allocation5 + $0x2f0] sm:$0xff]
    %v268 = vld [vmem:[#allocation5 + $0x2f8] sm:$0xff]
    %v269 = vld [vmem:[#allocation5 + $0x300] sm:$0xff]
    %v270 = vld [vmem:[#allocation5 + $0x308] sm:$0xff]
    %v271 = vld [vmem:[#allocation5 + $0x310] sm:$0xff]
    %v272 = vld [vmem:[#allocation5 + $0x318] sm:$0xff]
    %v273 = vld [vmem:[#allocation5 + $0x320] sm:$0xff]
    %v274 = vld [vmem:[#allocation5 + $0x328] sm:$0xff]
    %v275 = vld [vmem:[#allocation5 + $0x330] sm:$0xff]
    %v276 = vld [vmem:[#allocation5 + $0x338] sm:$0xff]
    %v277 = vld [vmem:[#allocation5 + $0x340] sm:$0xff]
    %v278 = vld [vmem:[#allocation5 + $0x348] sm:$0xff]
    %v279 = vld [vmem:[#allocation5 + $0x350] sm:$0xff]
    %v280 = vld [vmem:[#allocation5 + $0x358] sm:$0xff]
    %v281 = vld [vmem:[#allocation5 + $0x360] sm:$0xff]
    %v282 = vld [vmem:[#allocation5 + $0x368] sm:$0xff]
    %v283 = vld [vmem:[#allocation5 + $0x370] sm:$0xff]
    %v284 = vld [vmem:[#allocation5 + $0x378] sm:$0xff]
    %v285 = vld [vmem:[#allocation5 + $0x380] sm:$0xff]
    %v286 = vld [vmem:[#allocation5 + $0x388] sm:$0xff]
    %v287 = vld [vmem:[#allocation5 + $0x390] sm:$0xff]
    %v288 = vld [vmem:[#allocation5 + $0x398] sm:$0xff]
    %v289 = vld [vmem:[#allocation5 + $0x3a0] sm:$0xff]
    %v290 = vld [vmem:[#allocation5 + $0x3a8] sm:$0xff]
    %v291 = vld [vmem:[#allocation5 + $0x3b0] sm:$0xff]
    %v292 = vld [vmem:[#allocation5 + $0x3b8] sm:$0xff]
    %v293 = vld [vmem:[#allocation5 + $0x3c0] sm:$0xff]
    %v294 = vld [vmem:[#allocation5 + $0x3c8] sm:$0xff]
    %v295 = vld [vmem:[#allocation5 + $0x3d0] sm:$0xff]
    %v296 = vld [vmem:[#allocation5 + $0x3d8] sm:$0xff]
    %v297 = vld [vmem:[#allocation5 + $0x3e0] sm:$0xff]
    %v298 = vld [vmem:[#allocation5 + $0x3e8] sm:$0xff]
    %v299 = vld [vmem:[#allocation5 + $0x3f0] sm:$0xff]
    %v300 = vld [vmem:[#allocation5 + $0x3f8] sm:$0xff]
    %v301 = vld [vmem:[#allocation5 + $0x400] sm:$0xff]
    %v302 = vld [vmem:[#allocation5 + $0x408] sm:$0xff]
    %v303 = vld [vmem:[#allocation5 + $0x410] sm:$0xff]
    %v304 = vld [vmem:[#allocation5 + $0x418] sm:$0xff]
    %v305 = vld [vmem:[#allocation5 + $0x420] sm:$0xff]
    %v306 = vld [vmem:[#allocation5 + $0x428] sm:$0xff]
    %v307 = vld [vmem:[#allocation5 + $0x430] sm:$0xff]
    %v308 = vld [vmem:[#allocation5 + $0x438] sm:$0xff]
    %v309 = vld [vmem:[#allocation5 + $0x440] sm:$0xff]
    %v310 = vld [vmem:[#allocation5 + $0x448] sm:$0xff]
    %v311 = vld [vmem:[#allocation5 + $0x450] sm:$0xff]
    %v312 = vld [vmem:[#allocation5 + $0x458] sm:$0xff]
    %v313 = vld [vmem:[#allocation5 + $0x460] sm:$0xff]
    %v314 = vld [vmem:[#allocation5 + $0x468] sm:$0xff]
    %v315 = vld [vmem:[#allocation5 + $0x470] sm:$0xff]
    %v316 = vld [vmem:[#allocation5 + $0x478] sm:$0xff]
    %v317 = vld [vmem:[#allocation5 + $0x480] sm:$0xff]
    %v318 = vld [vmem:[#allocation5 + $0x488] sm:$0xff]
    %v319 = vld [vmem:[#allocation5 + $0x490] sm:$0xff]
    %v320 = vld [vmem:[#allocation5 + $0x498] sm:$0xff]
    %v321 = vld [vmem:[#allocation5 + $0x4a0] sm:$0xff]
    %v322 = vld [vmem:[#allocation5 + $0x4a8] sm:$0xff]
    %v323 = vld [vmem:[#allocation5 + $0x4b0] sm:$0xff]
    %v324 = vld [vmem:[#allocation5 + $0x4b8] sm:$0xff]
    %v325 = vld [vmem:[#allocation5 + $0x4c0] sm:$0xff]
    %v326 = vld [vmem:[#allocation5 + $0x4c8] sm:$0xff]
    %v327 = vld [vmem:[#allocation5 + $0x4d0] sm:$0xff]
    %v328 = vld [vmem:[#allocation5 + $0x4d8] sm:$0xff]
    %v329 = vld [vmem:[#allocation5 + $0x4e0] sm:$0xff]
    %v330 = vld [vmem:[#allocation5 + $0x4e8] sm:$0xff]
    %v331 = vld [vmem:[#allocation5 + $0x4f0] sm:$0xff]
    %v332 = vld [vmem:[#allocation5 + $0x4f8] sm:$0xff]
    %v333 = vld [vmem:[#allocation5 + $0x500] sm:$0xff]
    %v334 = vld [vmem:[#allocation5 + $0x508] sm:$0xff]
    %v335 = vld [vmem:[#allocation5 + $0x510] sm:$0xff]
    %v336 = vld [vmem:[#allocation5 + $0x518] sm:$0xff]
    %v337 = vld [vmem:[#allocation5 + $0x520] sm:$0xff]
    %v338 = vld [vmem:[#allocation5 + $0x528] sm:$0xff]
    %v339 = vld [vmem:[#allocation5 + $0x530] sm:$0xff]
    %v340 = vld [vmem:[#allocation5 + $0x538] sm:$0xff]
    %v341 = vld [vmem:[#allocation5 + $0x540] sm:$0xff]
    %v342 = vld [vmem:[#allocation5 + $0x548] sm:$0xff]
    %v343 = vld [vmem:[#allocation5 + $0x550] sm:$0xff]
    %v344 = vld [vmem:[#allocation5 + $0x558] sm:$0xff]
    %v345 = vld [vmem:[#allocation5 + $0x560] sm:$0xff]
    %v346 = vld [vmem:[#allocation5 + $0x568] sm:$0xff]
    %v347 = vld [vmem:[#allocation5 + $0x570] sm:$0xff]
    %v348 = vld [vmem:[#allocation5 + $0x578] sm:$0xff]
    %v349 = vld [vmem:[#allocation5 + $0x580] sm:$0xff]
    %v350 = vld [vmem:[#allocation5 + $0x588] sm:$0xff]
    %v351 = vld [vmem:[#allocation5 + $0x590] sm:$0xff]
    %v352 = vld [vmem:[#allocation5 + $0x598] sm:$0xff]
    %v353 = vld [vmem:[#allocation5 + $0x5a0] sm:$0xff]
    %v354 = vld [vmem:[#allocation5 + $0x5a8] sm:$0xff]
    %v355 = vld [vmem:[#allocation5 + $0x5b0] sm:$0xff]
    %v356 = vld [vmem:[#allocation5 + $0x5b8] sm:$0xff]
    %v357 = vld [vmem:[#allocation5 + $0x5c0] sm:$0xff]
    %v358 = vld [vmem:[#allocation5 + $0x5c8] sm:$0xff]
    %v359 = vld [vmem:[#allocation5 + $0x5d0] sm:$0xff]
    %v360 = vld [vmem:[#allocation5 + $0x5d8] sm:$0xff]
    %v361 = vld [vmem:[#allocation5 + $0x5e0] sm:$0xff]
    %v362 = vld [vmem:[#allocation5 + $0x5e8] sm:$0xff]
    %v363 = vld [vmem:[#allocation5 + $0x5f0] sm:$0xff]
    %v364 = vld [vmem:[#allocation5 + $0x5f8] sm:$0xff]
    %v365 = vld [vmem:[#allocation5 + $0x600] sm:$0xff]
    %v366 = vld [vmem:[#allocation5 + $0x608] sm:$0xff]
    %v367 = vld [vmem:[#allocation5 + $0x610] sm:$0xff]
    %v368 = vld [vmem:[#allocation5 + $0x618] sm:$0xff]
    %v369 = vld [vmem:[#allocation5 + $0x620] sm:$0xff]
    %v370 = vld [vmem:[#allocation5 + $0x628] sm:$0xff]
    %v371 = vld [vmem:[#allocation5 + $0x630] sm:$0xff]
    %v372 = vld [vmem:[#allocation5 + $0x638] sm:$0xff]
    %v373 = vld [vmem:[#allocation5 + $0x640] sm:$0xff]
    %v374 = vld [vmem:[#allocation5 + $0x648] sm:$0xff]
    %v375 = vld [vmem:[#allocation5 + $0x650] sm:$0xff]
    %v376 = vld [vmem:[#allocation5 + $0x658] sm:$0xff]
    %v377 = vld [vmem:[#allocation5 + $0x660] sm:$0xff]
    %v378 = vld [vmem:[#allocation5 + $0x668] sm:$0xff]
    %v379 = vld [vmem:[#allocation5 + $0x670] sm:$0xff]
    %v380 = vld [vmem:[#allocation5 + $0x678] sm:$0xff]
    %v381 = vld [vmem:[#allocation5 + $0x680] sm:$0xff]
    %v382 = vld [vmem:[#allocation5 + $0x688] sm:$0xff]
    %v383 = vld [vmem:[#allocation5 + $0x690] sm:$0xff]
    %v384 = vld [vmem:[#allocation5 + $0x698] sm:$0xff]
    %v385 = vld [vmem:[#allocation5 + $0x6a0] sm:$0xff]
    %v386 = vld [vmem:[#allocation5 + $0x6a8] sm:$0xff]
    %v387 = vld [vmem:[#allocation5 + $0x6b0] sm:$0xff]
    %v388 = vld [vmem:[#allocation5 + $0x6b8] sm:$0xff]
    %v389 = vld [vmem:[#allocation5 + $0x6c0] sm:$0xff]
    %v390 = vld [vmem:[#allocation5 + $0x6c8] sm:$0xff]
    %v391 = vld [vmem:[#allocation5 + $0x6d0] sm:$0xff]
    %v392 = vld [vmem:[#allocation5 + $0x6d8] sm:$0xff]
    %v393 = vld [vmem:[#allocation5 + $0x6e0] sm:$0xff]
    %v394 = vld [vmem:[#allocation5 + $0x6e8] sm:$0xff]
    %v395 = vld [vmem:[#allocation5 + $0x6f0] sm:$0xff]
    %v396 = vld [vmem:[#allocation5 + $0x6f8] sm:$0xff]
    %v397 = vld [vmem:[#allocation5 + $0x700] sm:$0xff]
    %v398 = vld [vmem:[#allocation5 + $0x708] sm:$0xff]
    %v399 = vld [vmem:[#allocation5 + $0x710] sm:$0xff]
    %v400 = vld [vmem:[#allocation5 + $0x718] sm:$0xff]
    %v401 = vld [vmem:[#allocation5 + $0x720] sm:$0xff]
    %v402 = vld [vmem:[#allocation5 + $0x728] sm:$0xff]
    %v403 = vld [vmem:[#allocation5 + $0x730] sm:$0xff]
    %v404 = vld [vmem:[#allocation5 + $0x738] sm:$0xff]
    %v405 = vld [vmem:[#allocation5 + $0x740] sm:$0xff]
    %v406 = vld [vmem:[#allocation5 + $0x748] sm:$0xff]
    %v407 = vld [vmem:[#allocation5 + $0x750] sm:$0xff]
    %v408 = vld [vmem:[#allocation5 + $0x758] sm:$0xff]
    %v409 = vld [vmem:[#allocation5 + $0x760] sm:$0xff]
    %v410 = vld [vmem:[#allocation5 + $0x768] sm:$0xff]
    %v411 = vld [vmem:[#allocation5 + $0x770] sm:$0xff]
    %v412 = vld [vmem:[#allocation5 + $0x778] sm:$0xff]
    %v413 = vld [vmem:[#allocation5 + $0x780] sm:$0xff]
    %v414 = vld [vmem:[#allocation5 + $0x788] sm:$0xff]
    %v415 = vld [vmem:[#allocation5 + $0x790] sm:$0xff]
    %v416 = vld [vmem:[#allocation5 + $0x798] sm:$0xff]
    %v417 = vld [vmem:[#allocation5 + $0x7a0] sm:$0xff]
    %v418 = vld [vmem:[#allocation5 + $0x7a8] sm:$0xff]
    %v419 = vld [vmem:[#allocation5 + $0x7b0] sm:$0xff]
    %v420 = vld [vmem:[#allocation5 + $0x7b8] sm:$0xff]
    %v421 = vld [vmem:[#allocation5 + $0x7c0] sm:$0xff]
    %v422 = vld [vmem:[#allocation5 + $0x7c8] sm:$0xff]
    %v423 = vld [vmem:[#allocation5 + $0x7d0] sm:$0xff]
    %v424 = vld [vmem:[#allocation5 + $0x7d8] sm:$0xff]
    %v425 = vld [vmem:[#allocation5 + $0x7e0] sm:$0xff]
    %v426 = vld [vmem:[#allocation5 + $0x7e8] sm:$0xff]
    %v427 = vld [vmem:[#allocation5 + $0x7f0] sm:$0xff]
    %v428 = vld [vmem:[#allocation5 + $0x7f8] sm:$0xff]
    %v429 = vld [vmem:[#allocation5 + $0x800] sm:$0xff]
    %v430 = vld [vmem:[#allocation5 + $0x808] sm:$0xff]
    %v431 = vld [vmem:[#allocation5 + $0x810] sm:$0xff]
    %v432 = vld [vmem:[#allocation5 + $0x818] sm:$0xff]
    %v433 = vld [vmem:[#allocation5 + $0x820] sm:$0xff]
    %v434 = vld [vmem:[#allocation5 + $0x828] sm:$0xff]
    %v435 = vld [vmem:[#allocation5 + $0x830] sm:$0xff]
    %v436 = vld [vmem:[#allocation5 + $0x838] sm:$0xff]
    %v437 = vld [vmem:[#allocation5 + $0x840] sm:$0xff]
    %v438 = vld [vmem:[#allocation5 + $0x848] sm:$0xff]
    %v439 = vld [vmem:[#allocation5 + $0x850] sm:$0xff]
    %v440 = vld [vmem:[#allocation5 + $0x858] sm:$0xff]
    %v441 = vld [vmem:[#allocation5 + $0x860] sm:$0xff]
    %v442 = vld [vmem:[#allocation5 + $0x868] sm:$0xff]
    %v443 = vld [vmem:[#allocation5 + $0x870] sm:$0xff]
    %v444 = vld [vmem:[#allocation5 + $0x878] sm:$0xff]
    %v445 = vld [vmem:[#allocation5 + $0x880] sm:$0xff]
    %v446 = vld [vmem:[#allocation5 + $0x888] sm:$0xff]
    %v447 = vld [vmem:[#allocation5 + $0x890] sm:$0xff]
    %v448 = vld [vmem:[#allocation5 + $0x898] sm:$0xff]
    %v449 = vld [vmem:[#allocation5 + $0x8a0] sm:$0xff]
    %v450 = vld [vmem:[#allocation5 + $0x8a8] sm:$0xff]
    %v451 = vld [vmem:[#allocation5 + $0x8b0] sm:$0xff]
    %v452 = vld [vmem:[#allocation5 + $0x8b8] sm:$0xff]
    %v453 = vld [vmem:[#allocation5 + $0x8c0] sm:$0xff]
    %v454 = vld [vmem:[#allocation5 + $0x8c8] sm:$0xff]
    %v455 = vld [vmem:[#allocation5 + $0x8d0] sm:$0xff]
    %v456 = vld [vmem:[#allocation5 + $0x8d8] sm:$0xff]
    %v457 = vld [vmem:[#allocation5 + $0x8e0] sm:$0xff]
    %v458 = vld [vmem:[#allocation5 + $0x8e8] sm:$0xff]
    %v459 = vld [vmem:[#allocation5 + $0x8f0] sm:$0xff]
    %v460 = vld [vmem:[#allocation5 + $0x8f8] sm:$0xff]
    %v461 = vld [vmem:[#allocation5 + $0x900] sm:$0xff]
    %v462 = vld [vmem:[#allocation5 + $0x908] sm:$0xff]
    %v463 = vld [vmem:[#allocation5 + $0x910] sm:$0xff]
    %v464 = vld [vmem:[#allocation5 + $0x918] sm:$0xff]
    %v465 = vld [vmem:[#allocation5 + $0x920] sm:$0xff]
    %v466 = vld [vmem:[#allocation5 + $0x928] sm:$0xff]
    %v467 = vld [vmem:[#allocation5 + $0x930] sm:$0xff]
    %v468 = vld [vmem:[#allocation5 + $0x938] sm:$0xff]
    %v469 = vld [vmem:[#allocation5 + $0x940] sm:$0xff]
    %v470 = vld [vmem:[#allocation5 + $0x948] sm:$0xff]
    %v471 = vld [vmem:[#allocation5 + $0x950] sm:$0xff]
    %v472 = vld [vmem:[#allocation5 + $0x958] sm:$0xff]
    %v473 = vld [vmem:[#allocation5 + $0x960] sm:$0xff]
    %v474 = vld [vmem:[#allocation5 + $0x968] sm:$0xff]
    %v475 = vld [vmem:[#allocation5 + $0x970] sm:$0xff]
    %v476 = vld [vmem:[#allocation5 + $0x978] sm:$0xff]
    %v477 = vld [vmem:[#allocation5 + $0x980] sm:$0xff]
    %v478 = vld [vmem:[#allocation5 + $0x988] sm:$0xff]
    %v479 = vld [vmem:[#allocation5 + $0x990] sm:$0xff]
    %v480 = vld [vmem:[#allocation5 + $0x998] sm:$0xff]
    %v481 = vld [vmem:[#allocation5 + $0x9a0] sm:$0xff]
    %v482 = vld [vmem:[#allocation5 + $0x9a8] sm:$0xff]
    %v483 = vld [vmem:[#allocation5 + $0x9b0] sm:$0xff]
    %v484 = vld [vmem:[#allocation5 + $0x9b8] sm:$0xff]
    %v485 = vld [vmem:[#allocation5 + $0x9c0] sm:$0xff]
    %v486 = vld [vmem:[#allocation5 + $0x9c8] sm:$0xff]
    %v487 = vld [vmem:[#allocation5 + $0x9d0] sm:$0xff]
    %v488 = vld [vmem:[#allocation5 + $0x9d8] sm:$0xff]
    %v489 = vld [vmem:[#allocation5 + $0x9e0] sm:$0xff]
    %v490 = vld [vmem:[#allocation5 + $0x9e8] sm:$0xff]
    %v491 = vld [vmem:[#allocation5 + $0x9f0] sm:$0xff]
    %v492 = vld [vmem:[#allocation5 + $0x9f8] sm:$0xff]
    %v493 = vld [vmem:[#allocation5 + $0xa00] sm:$0xff]
    %v494 = vld [vmem:[#allocation5 + $0xa08] sm:$0xff]
    %v495 = vld [vmem:[#allocation5 + $0xa10] sm:$0xff]
    %v496 = vld [vmem:[#allocation5 + $0xa18] sm:$0xff]
    %v497 = vld [vmem:[#allocation5 + $0xa20] sm:$0xff]
    %v498 = vld [vmem:[#allocation5 + $0xa28] sm:$0xff]
    %v499 = vld [vmem:[#allocation5 + $0xa30] sm:$0xff]
    %v500 = vld [vmem:[#allocation5 + $0xa38] sm:$0xff]
    %v501 = vld [vmem:[#allocation5 + $0xa40] sm:$0xff]
    %v502 = vld [vmem:[#allocation5 + $0xa48] sm:$0xff]
    %v503 = vld [vmem:[#allocation5 + $0xa50] sm:$0xff]
    %v504 = vld [vmem:[#allocation5 + $0xa58] sm:$0xff]
    %v505 = vld [vmem:[#allocation5 + $0xa60] sm:$0xff]
    %v506 = vld [vmem:[#allocation5 + $0xa68] sm:$0xff]
    %v507 = vld [vmem:[#allocation5 + $0xa70] sm:$0xff]
    %v508 = vld [vmem:[#allocation5 + $0xa78] sm:$0xff]
    %v509 = vld [vmem:[#allocation5 + $0xa80] sm:$0xff]
    %v510 = vld [vmem:[#allocation5 + $0xa88] sm:$0xff]
    %v511 = vld [vmem:[#allocation5 + $0xa90] sm:$0xff]
    %v512 = vld [vmem:[#allocation5 + $0xa98] sm:$0xff]
    %v513 = vld [vmem:[#allocation5 + $0xaa0] sm:$0xff]
    %v514 = vld [vmem:[#allocation5 + $0xaa8] sm:$0xff]
    %v515 = vld [vmem:[#allocation5 + $0xab0] sm:$0xff]
    %v516 = vld [vmem:[#allocation5 + $0xab8] sm:$0xff]
    %v517 = vld [vmem:[#allocation5 + $0xac0] sm:$0xff]
    %v518 = vld [vmem:[#allocation5 + $0xac8] sm:$0xff]
    %v519 = vld [vmem:[#allocation5 + $0xad0] sm:$0xff]
    %v520 = vld [vmem:[#allocation5 + $0xad8] sm:$0xff]
    %v521 = vld [vmem:[#allocation5 + $0xae0] sm:$0xff]
    %v522 = vld [vmem:[#allocation5 + $0xae8] sm:$0xff]
    %v523 = vld [vmem:[#allocation5 + $0xaf0] sm:$0xff]
    %v524 = vld [vmem:[#allocation5 + $0xaf8] sm:$0xff]
    %v525 = vld [vmem:[#allocation5 + $0xb00] sm:$0xff]
    %v526 = vld [vmem:[#allocation5 + $0xb08] sm:$0xff]
    %v527 = vld [vmem:[#allocation5 + $0xb10] sm:$0xff]
    %v528 = vld [vmem:[#allocation5 + $0xb18] sm:$0xff]
    %v529 = vld [vmem:[#allocation5 + $0xb20] sm:$0xff]
    %v530 = vld [vmem:[#allocation5 + $0xb28] sm:$0xff]
    %v531 = vld [vmem:[#allocation5 + $0xb30] sm:$0xff]
    %v532 = vld [vmem:[#allocation5 + $0xb38] sm:$0xff]
    %v533 = vld [vmem:[#allocation5 + $0xb40] sm:$0xff]
    %v534 = vld [vmem:[#allocation5 + $0xb48] sm:$0xff]
    %v535 = vld [vmem:[#allocation5 + $0xb50] sm:$0xff]
    %v536 = vld [vmem:[#allocation5 + $0xb58] sm:$0xff]
    %v537 = vld [vmem:[#allocation5 + $0xb60] sm:$0xff]
    %v538 = vld [vmem:[#allocation5 + $0xb68] sm:$0xff]
    %v539 = vld [vmem:[#allocation5 + $0xb70] sm:$0xff]
    %v540 = vld [vmem:[#allocation5 + $0xb78] sm:$0xff]
    %v541 = vld [vmem:[#allocation5 + $0xb80] sm:$0xff]
    %v542 = vld [vmem:[#allocation5 + $0xb88] sm:$0xff]
    %v543 = vld [vmem:[#allocation5 + $0xb90] sm:$0xff]
    %v544 = vld [vmem:[#allocation5 + $0xb98] sm:$0xff]
    %v545 = vld [vmem:[#allocation5 + $0xba0] sm:$0xff]
    %v546 = vld [vmem:[#allocation5 + $0xba8] sm:$0xff]
    %v547 = vld [vmem:[#allocation5 + $0xbb0] sm:$0xff]
    %v548 = vld [vmem:[#allocation5 + $0xbb8] sm:$0xff]
    %v549 = vld [vmem:[#allocation5 + $0xbc0] sm:$0xff]
    %v550 = vld [vmem:[#allocation5 + $0xbc8] sm:$0xff]
    %v551 = vld [vmem:[#allocation5 + $0xbd0] sm:$0xff]
    %v552 = vld [vmem:[#allocation5 + $0xbd8] sm:$0xff]
    %v553 = vld [vmem:[#allocation5 + $0xbe0] sm:$0xff]
    %v554 = vld [vmem:[#allocation5 + $0xbe8] sm:$0xff]
    %v555 = vld [vmem:[#allocation5 + $0xbf0] sm:$0xff]
    %v556 = vld [vmem:[#allocation5 + $0xbf8] sm:$0xff]
    %v557 = vld [vmem:[#allocation5 + $0xc00] sm:$0xff]
    %v558 = vld [vmem:[#allocation5 + $0xc08] sm:$0xff]
    %v559 = vld [vmem:[#allocation5 + $0xc10] sm:$0xff]
    %v560 = vld [vmem:[#allocation5 + $0xc18] sm:$0xff]
    %v561 = vld [vmem:[#allocation5 + $0xc20] sm:$0xff]
    %v562 = vld [vmem:[#allocation5 + $0xc28] sm:$0xff]
    %v563 = vld [vmem:[#allocation5 + $0xc30] sm:$0xff]
    %v564 = vld [vmem:[#allocation5 + $0xc38] sm:$0xff]
    %v565 = vld [vmem:[#allocation5 + $0xc40] sm:$0xff]
    %v566 = vld [vmem:[#allocation5 + $0xc48] sm:$0xff]
    %v567 = vld [vmem:[#allocation5 + $0xc50] sm:$0xff]
    %v568 = vld [vmem:[#allocation5 + $0xc58] sm:$0xff]
    %v569 = vld [vmem:[#allocation5 + $0xc60] sm:$0xff]
    %v570 = vld [vmem:[#allocation5 + $0xc68] sm:$0xff]
    %v571 = vld [vmem:[#allocation5 + $0xc70] sm:$0xff]
    %v572 = vld [vmem:[#allocation5 + $0xc78] sm:$0xff]
    %v973 = vunpack.c.l.b16 %v173
    %v974 = vunpack.c.h.b16 %v173
    %v975 = vunpack.c.l.b16 %v174
    %v976 = vunpack.c.h.b16 %v174
    %v977 = vunpack.c.l.b16 %v175
    %v978 = vunpack.c.h.b16 %v175
    %v979 = vunpack.c.l.b16 %v176
    %v980 = vunpack.c.h.b16 %v176
    %v981 = vunpack.c.l.b16 %v177
    %v982 = vunpack.c.h.b16 %v177
    %v983 = vunpack.c.l.b16 %v178
    %v984 = vunpack.c.h.b16 %v178
    %v985 = vunpack.c.l.b16 %v179
    %v986 = vunpack.c.h.b16 %v179
    %v987 = vunpack.c.l.b16 %v180
    %v988 = vunpack.c.h.b16 %v180
    %v989 = vunpack.c.l.b16 %v181
    %v990 = vunpack.c.h.b16 %v181
    %v991 = vunpack.c.l.b16 %v182
    %v992 = vunpack.c.h.b16 %v182
    %v993 = vunpack.c.l.b16 %v183
    %v994 = vunpack.c.h.b16 %v183
    %v995 = vunpack.c.l.b16 %v184
    %v996 = vunpack.c.h.b16 %v184
    %v997 = vunpack.c.l.b16 %v185
    %v998 = vunpack.c.h.b16 %v185
    %v999 = vunpack.c.l.b16 %v186
    %v1000 = vunpack.c.h.b16 %v186
    %v1001 = vunpack.c.l.b16 %v187
    %v1002 = vunpack.c.h.b16 %v187
    %v1003 = vunpack.c.l.b16 %v188
    %v1004 = vunpack.c.h.b16 %v188
    %v1005 = vunpack.c.l.b16 %v189
    %v1006 = vunpack.c.h.b16 %v189
    %v1007 = vunpack.c.l.b16 %v190
    %v1008 = vunpack.c.h.b16 %v190
    %v1009 = vunpack.c.l.b16 %v191
    %v1010 = vunpack.c.h.b16 %v191
    %v1011 = vunpack.c.l.b16 %v192
    %v1012 = vunpack.c.h.b16 %v192
    %v1013 = vunpack.c.l.b16 %v193
    %v1014 = vunpack.c.h.b16 %v193
    %v1015 = vunpack.c.l.b16 %v194
    %v1016 = vunpack.c.h.b16 %v194
    %v1017 = vunpack.c.l.b16 %v195
    %v1018 = vunpack.c.h.b16 %v195
    %v1019 = vunpack.c.l.b16 %v196
    %v1020 = vunpack.c.h.b16 %v196
    %v1021 = vunpack.c.l.b16 %v197
    %v1022 = vunpack.c.h.b16 %v197
    %v1023 = vunpack.c.l.b16 %v198
    %v1024 = vunpack.c.h.b16 %v198
    %v1025 = vunpack.c.l.b16 %v199
    %v1026 = vunpack.c.h.b16 %v199
    %v1027 = vunpack.c.l.b16 %v200
    %v1028 = vunpack.c.h.b16 %v200
    %v1029 = vunpack.c.l.b16 %v201
    %v1030 = vunpack.c.h.b16 %v201
    %v1031 = vunpack.c.l.b16 %v202
    %v1032 = vunpack.c.h.b16 %v202
    %v1033 = vunpack.c.l.b16 %v203
    %v1034 = vunpack.c.h.b16 %v203
    %v1035 = vunpack.c.l.b16 %v204
    %v1036 = vunpack.c.h.b16 %v204
    %v1037 = vunpack.c.l.b16 %v205
    %v1038 = vunpack.c.h.b16 %v205
    %v1039 = vunpack.c.l.b16 %v206
    %v1040 = vunpack.c.h.b16 %v206
    %v1041 = vunpack.c.l.b16 %v207
    %v1042 = vunpack.c.h.b16 %v207
    %v1043 = vunpack.c.l.b16 %v208
    %v1044 = vunpack.c.h.b16 %v208
    %v1045 = vunpack.c.l.b16 %v209
    %v1046 = vunpack.c.h.b16 %v209
    %v1047 = vunpack.c.l.b16 %v210
    %v1048 = vunpack.c.h.b16 %v210
    %v1049 = vunpack.c.l.b16 %v211
    %v1050 = vunpack.c.h.b16 %v211
    %v1051 = vunpack.c.l.b16 %v212
    %v1052 = vunpack.c.h.b16 %v212
    %v1053 = vunpack.c.l.b16 %v213
    %v1054 = vunpack.c.h.b16 %v213
    %v1055 = vunpack.c.l.b16 %v214
    %v1056 = vunpack.c.h.b16 %v214
    %v1057 = vunpack.c.l.b16 %v215
    %v1058 = vunpack.c.h.b16 %v215
    %v1059 = vunpack.c.l.b16 %v216
    %v1060 = vunpack.c.h.b16 %v216
    %v1061 = vunpack.c.l.b16 %v217
    %v1062 = vunpack.c.h.b16 %v217
    %v1063 = vunpack.c.l.b16 %v218
    %v1064 = vunpack.c.h.b16 %v218
    %v1065 = vunpack.c.l.b16 %v219
    %v1066 = vunpack.c.h.b16 %v219
    %v1067 = vunpack.c.l.b16 %v220
    %v1068 = vunpack.c.h.b16 %v220
    %v1069 = vunpack.c.l.b16 %v221
    %v1070 = vunpack.c.h.b16 %v221
    %v1071 = vunpack.c.l.b16 %v222
    %v1072 = vunpack.c.h.b16 %v222
    %v1073 = vunpack.c.l.b16 %v223
    %v1074 = vunpack.c.h.b16 %v223
    %v1075 = vunpack.c.l.b16 %v224
    %v1076 = vunpack.c.h.b16 %v224
    %v1077 = vunpack.c.l.b16 %v225
    %v1078 = vunpack.c.h.b16 %v225
    %v1079 = vunpack.c.l.b16 %v226
    %v1080 = vunpack.c.h.b16 %v226
    %v1081 = vunpack.c.l.b16 %v227
    %v1082 = vunpack.c.h.b16 %v227
    %v1083 = vunpack.c.l.b16 %v228
    %v1084 = vunpack.c.h.b16 %v228
    %v1085 = vunpack.c.l.b16 %v229
    %v1086 = vunpack.c.h.b16 %v229
    %v1087 = vunpack.c.l.b16 %v230
    %v1088 = vunpack.c.h.b16 %v230
    %v1089 = vunpack.c.l.b16 %v231
    %v1090 = vunpack.c.h.b16 %v231
    %v1091 = vunpack.c.l.b16 %v232
    %v1092 = vunpack.c.h.b16 %v232
    %v1093 = vunpack.c.l.b16 %v233
    %v1094 = vunpack.c.h.b16 %v233
    %v1095 = vunpack.c.l.b16 %v234
    %v1096 = vunpack.c.h.b16 %v234
    %v1097 = vunpack.c.l.b16 %v235
    %v1098 = vunpack.c.h.b16 %v235
    %v1099 = vunpack.c.l.b16 %v236
    %v1100 = vunpack.c.h.b16 %v236
    %v1101 = vunpack.c.l.b16 %v237
    %v1102 = vunpack.c.h.b16 %v237
    %v1103 = vunpack.c.l.b16 %v238
    %v1104 = vunpack.c.h.b16 %v238
    %v1105 = vunpack.c.l.b16 %v239
    %v1106 = vunpack.c.h.b16 %v239
    %v1107 = vunpack.c.l.b16 %v240
    %v1108 = vunpack.c.h.b16 %v240
    %v1109 = vunpack.c.l.b16 %v241
    %v1110 = vunpack.c.h.b16 %v241
    %v1111 = vunpack.c.l.b16 %v242
    %v1112 = vunpack.c.h.b16 %v242
    %v1113 = vunpack.c.l.b16 %v243
    %v1114 = vunpack.c.h.b16 %v243
    %v1115 = vunpack.c.l.b16 %v244
    %v1116 = vunpack.c.h.b16 %v244
    %v1117 = vunpack.c.l.b16 %v245
    %v1118 = vunpack.c.h.b16 %v245
    %v1119 = vunpack.c.l.b16 %v246
    %v1120 = vunpack.c.h.b16 %v246
    %v1121 = vunpack.c.l.b16 %v247
    %v1122 = vunpack.c.h.b16 %v247
    %v1123 = vunpack.c.l.b16 %v248
    %v1124 = vunpack.c.h.b16 %v248
    %v1125 = vunpack.c.l.b16 %v249
    %v1126 = vunpack.c.h.b16 %v249
    %v1127 = vunpack.c.l.b16 %v250
    %v1128 = vunpack.c.h.b16 %v250
    %v1129 = vunpack.c.l.b16 %v251
    %v1130 = vunpack.c.h.b16 %v251
    %v1131 = vunpack.c.l.b16 %v252
    %v1132 = vunpack.c.h.b16 %v252
    %v1133 = vunpack.c.l.b16 %v253
    %v1134 = vunpack.c.h.b16 %v253
    %v1135 = vunpack.c.l.b16 %v254
    %v1136 = vunpack.c.h.b16 %v254
    %v1137 = vunpack.c.l.b16 %v255
    %v1138 = vunpack.c.h.b16 %v255
    %v1139 = vunpack.c.l.b16 %v256
    %v1140 = vunpack.c.h.b16 %v256
    %v1141 = vunpack.c.l.b16 %v257
    %v1142 = vunpack.c.h.b16 %v257
    %v1143 = vunpack.c.l.b16 %v258
    %v1144 = vunpack.c.h.b16 %v258
    %v1145 = vunpack.c.l.b16 %v259
    %v1146 = vunpack.c.h.b16 %v259
    %v1147 = vunpack.c.l.b16 %v260
    %v1148 = vunpack.c.h.b16 %v260
    %v1149 = vunpack.c.l.b16 %v261
    %v1150 = vunpack.c.h.b16 %v261
    %v1151 = vunpack.c.l.b16 %v262
    %v1152 = vunpack.c.h.b16 %v262
    %v1153 = vunpack.c.l.b16 %v263
    %v1154 = vunpack.c.h.b16 %v263
    %v1155 = vunpack.c.l.b16 %v264
    %v1156 = vunpack.c.h.b16 %v264
    %v1157 = vunpack.c.l.b16 %v265
    %v1158 = vunpack.c.h.b16 %v265
    %v1159 = vunpack.c.l.b16 %v266
    %v1160 = vunpack.c.h.b16 %v266
    %v1161 = vunpack.c.l.b16 %v267
    %v1162 = vunpack.c.h.b16 %v267
    %v1163 = vunpack.c.l.b16 %v268
    %v1164 = vunpack.c.h.b16 %v268
    %v1165 = vunpack.c.l.b16 %v269
    %v1166 = vunpack.c.h.b16 %v269
    %v1167 = vunpack.c.l.b16 %v270
    %v1168 = vunpack.c.h.b16 %v270
    %v1169 = vunpack.c.l.b16 %v271
    %v1170 = vunpack.c.h.b16 %v271
    %v1171 = vunpack.c.l.b16 %v272
    %v1172 = vunpack.c.h.b16 %v272
    %v1173 = vunpack.c.l.b16 %v273
    %v1174 = vunpack.c.h.b16 %v273
    %v1175 = vunpack.c.l.b16 %v274
    %v1176 = vunpack.c.h.b16 %v274
    %v1177 = vunpack.c.l.b16 %v275
    %v1178 = vunpack.c.h.b16 %v275
    %v1179 = vunpack.c.l.b16 %v276
    %v1180 = vunpack.c.h.b16 %v276
    %v1181 = vunpack.c.l.b16 %v277
    %v1182 = vunpack.c.h.b16 %v277
    %v1183 = vunpack.c.l.b16 %v278
    %v1184 = vunpack.c.h.b16 %v278
    %v1185 = vunpack.c.l.b16 %v279
    %v1186 = vunpack.c.h.b16 %v279
    %v1187 = vunpack.c.l.b16 %v280
    %v1188 = vunpack.c.h.b16 %v280
    %v1189 = vunpack.c.l.b16 %v281
    %v1190 = vunpack.c.h.b16 %v281
    %v1191 = vunpack.c.l.b16 %v282
    %v1192 = vunpack.c.h.b16 %v282
    %v1193 = vunpack.c.l.b16 %v283
    %v1194 = vunpack.c.h.b16 %v283
    %v1195 = vunpack.c.l.b16 %v284
    %v1196 = vunpack.c.h.b16 %v284
    %v1197 = vunpack.c.l.b16 %v285
    %v1198 = vunpack.c.h.b16 %v285
    %v1199 = vunpack.c.l.b16 %v286
    %v1200 = vunpack.c.h.b16 %v286
    %v1201 = vunpack.c.l.b16 %v287
    %v1202 = vunpack.c.h.b16 %v287
    %v1203 = vunpack.c.l.b16 %v288
    %v1204 = vunpack.c.h.b16 %v288
    %v1205 = vunpack.c.l.b16 %v289
    %v1206 = vunpack.c.h.b16 %v289
    %v1207 = vunpack.c.l.b16 %v290
    %v1208 = vunpack.c.h.b16 %v290
    %v1209 = vunpack.c.l.b16 %v291
    %v1210 = vunpack.c.h.b16 %v291
    %v1211 = vunpack.c.l.b16 %v292
    %v1212 = vunpack.c.h.b16 %v292
    %v1213 = vunpack.c.l.b16 %v293
    %v1214 = vunpack.c.h.b16 %v293
    %v1215 = vunpack.c.l.b16 %v294
    %v1216 = vunpack.c.h.b16 %v294
    %v1217 = vunpack.c.l.b16 %v295
    %v1218 = vunpack.c.h.b16 %v295
    %v1219 = vunpack.c.l.b16 %v296
    %v1220 = vunpack.c.h.b16 %v296
    %v1221 = vunpack.c.l.b16 %v297
    %v1222 = vunpack.c.h.b16 %v297
    %v1223 = vunpack.c.l.b16 %v298
    %v1224 = vunpack.c.h.b16 %v298
    %v1225 = vunpack.c.l.b16 %v299
    %v1226 = vunpack.c.h.b16 %v299
    %v1227 = vunpack.c.l.b16 %v300
    %v1228 = vunpack.c.h.b16 %v300
    %v1229 = vunpack.c.l.b16 %v301
    %v1230 = vunpack.c.h.b16 %v301
    %v1231 = vunpack.c.l.b16 %v302
    %v1232 = vunpack.c.h.b16 %v302
    %v1233 = vunpack.c.l.b16 %v303
    %v1234 = vunpack.c.h.b16 %v303
    %v1235 = vunpack.c.l.b16 %v304
    %v1236 = vunpack.c.h.b16 %v304
    %v1237 = vunpack.c.l.b16 %v305
    %v1238 = vunpack.c.h.b16 %v305
    %v1239 = vunpack.c.l.b16 %v306
    %v1240 = vunpack.c.h.b16 %v306
    %v1241 = vunpack.c.l.b16 %v307
    %v1242 = vunpack.c.h.b16 %v307
    %v1243 = vunpack.c.l.b16 %v308
    %v1244 = vunpack.c.h.b16 %v308
    %v1245 = vunpack.c.l.b16 %v309
    %v1246 = vunpack.c.h.b16 %v309
    %v1247 = vunpack.c.l.b16 %v310
    %v1248 = vunpack.c.h.b16 %v310
    %v1249 = vunpack.c.l.b16 %v311
    %v1250 = vunpack.c.h.b16 %v311
    %v1251 = vunpack.c.l.b16 %v312
    %v1252 = vunpack.c.h.b16 %v312
    %v1253 = vunpack.c.l.b16 %v313
    %v1254 = vunpack.c.h.b16 %v313
    %v1255 = vunpack.c.l.b16 %v314
    %v1256 = vunpack.c.h.b16 %v314
    %v1257 = vunpack.c.l.b16 %v315
    %v1258 = vunpack.c.h.b16 %v315
    %v1259 = vunpack.c.l.b16 %v316
    %v1260 = vunpack.c.h.b16 %v316
    %v1261 = vunpack.c.l.b16 %v317
    %v1262 = vunpack.c.h.b16 %v317
    %v1263 = vunpack.c.l.b16 %v318
    %v1264 = vunpack.c.h.b16 %v318
    %v1265 = vunpack.c.l.b16 %v319
    %v1266 = vunpack.c.h.b16 %v319
    %v1267 = vunpack.c.l.b16 %v320
    %v1268 = vunpack.c.h.b16 %v320
    %v1269 = vunpack.c.l.b16 %v321
    %v1270 = vunpack.c.h.b16 %v321
    %v1271 = vunpack.c.l.b16 %v322
    %v1272 = vunpack.c.h.b16 %v322
    %v1273 = vunpack.c.l.b16 %v323
    %v1274 = vunpack.c.h.b16 %v323
    %v1275 = vunpack.c.l.b16 %v324
    %v1276 = vunpack.c.h.b16 %v324
    %v1277 = vunpack.c.l.b16 %v325
    %v1278 = vunpack.c.h.b16 %v325
    %v1279 = vunpack.c.l.b16 %v326
    %v1280 = vunpack.c.h.b16 %v326
    %v1281 = vunpack.c.l.b16 %v327
    %v1282 = vunpack.c.h.b16 %v327
    %v1283 = vunpack.c.l.b16 %v328
    %v1284 = vunpack.c.h.b16 %v328
    %v1285 = vunpack.c.l.b16 %v329
    %v1286 = vunpack.c.h.b16 %v329
    %v1287 = vunpack.c.l.b16 %v330
    %v1288 = vunpack.c.h.b16 %v330
    %v1289 = vunpack.c.l.b16 %v331
    %v1290 = vunpack.c.h.b16 %v331
    %v1291 = vunpack.c.l.b16 %v332
    %v1292 = vunpack.c.h.b16 %v332
    %v1293 = vunpack.c.l.b16 %v333
    %v1294 = vunpack.c.h.b16 %v333
    %v1295 = vunpack.c.l.b16 %v334
    %v1296 = vunpack.c.h.b16 %v334
    %v1297 = vunpack.c.l.b16 %v335
    %v1298 = vunpack.c.h.b16 %v335
    %v1299 = vunpack.c.l.b16 %v336
    %v1300 = vunpack.c.h.b16 %v336
    %v1301 = vunpack.c.l.b16 %v337
    %v1302 = vunpack.c.h.b16 %v337
    %v1303 = vunpack.c.l.b16 %v338
    %v1304 = vunpack.c.h.b16 %v338
    %v1305 = vunpack.c.l.b16 %v339
    %v1306 = vunpack.c.h.b16 %v339
    %v1307 = vunpack.c.l.b16 %v340
    %v1308 = vunpack.c.h.b16 %v340
    %v1309 = vunpack.c.l.b16 %v341
    %v1310 = vunpack.c.h.b16 %v341
    %v1311 = vunpack.c.l.b16 %v342
    %v1312 = vunpack.c.h.b16 %v342
    %v1313 = vunpack.c.l.b16 %v343
    %v1314 = vunpack.c.h.b16 %v343
    %v1315 = vunpack.c.l.b16 %v344
    %v1316 = vunpack.c.h.b16 %v344
    %v1317 = vunpack.c.l.b16 %v345
    %v1318 = vunpack.c.h.b16 %v345
    %v1319 = vunpack.c.l.b16 %v346
    %v1320 = vunpack.c.h.b16 %v346
    %v1321 = vunpack.c.l.b16 %v347
    %v1322 = vunpack.c.h.b16 %v347
    %v1323 = vunpack.c.l.b16 %v348
    %v1324 = vunpack.c.h.b16 %v348
    %v1325 = vunpack.c.l.b16 %v349
    %v1326 = vunpack.c.h.b16 %v349
    %v1327 = vunpack.c.l.b16 %v350
    %v1328 = vunpack.c.h.b16 %v350
    %v1329 = vunpack.c.l.b16 %v351
    %v1330 = vunpack.c.h.b16 %v351
    %v1331 = vunpack.c.l.b16 %v352
    %v1332 = vunpack.c.h.b16 %v352
    %v1333 = vunpack.c.l.b16 %v353
    %v1334 = vunpack.c.h.b16 %v353
    %v1335 = vunpack.c.l.b16 %v354
    %v1336 = vunpack.c.h.b16 %v354
    %v1337 = vunpack.c.l.b16 %v355
    %v1338 = vunpack.c.h.b16 %v355
    %v1339 = vunpack.c.l.b16 %v356
    %v1340 = vunpack.c.h.b16 %v356
    %v1341 = vunpack.c.l.b16 %v357
    %v1342 = vunpack.c.h.b16 %v357
    %v1343 = vunpack.c.l.b16 %v358
    %v1344 = vunpack.c.h.b16 %v358
    %v1345 = vunpack.c.l.b16 %v359
    %v1346 = vunpack.c.h.b16 %v359
    %v1347 = vunpack.c.l.b16 %v360
    %v1348 = vunpack.c.h.b16 %v360
    %v1349 = vunpack.c.l.b16 %v361
    %v1350 = vunpack.c.h.b16 %v361
    %v1351 = vunpack.c.l.b16 %v362
    %v1352 = vunpack.c.h.b16 %v362
    %v1353 = vunpack.c.l.b16 %v363
    %v1354 = vunpack.c.h.b16 %v363
    %v1355 = vunpack.c.l.b16 %v364
    %v1356 = vunpack.c.h.b16 %v364
    %v1357 = vunpack.c.l.b16 %v365
    %v1358 = vunpack.c.h.b16 %v365
    %v1359 = vunpack.c.l.b16 %v366
    %v1360 = vunpack.c.h.b16 %v366
    %v1361 = vunpack.c.l.b16 %v367
    %v1362 = vunpack.c.h.b16 %v367
    %v1363 = vunpack.c.l.b16 %v368
    %v1364 = vunpack.c.h.b16 %v368
    %v1365 = vunpack.c.l.b16 %v369
    %v1366 = vunpack.c.h.b16 %v369
    %v1367 = vunpack.c.l.b16 %v370
    %v1368 = vunpack.c.h.b16 %v370
    %v1369 = vunpack.c.l.b16 %v371
    %v1370 = vunpack.c.h.b16 %v371
    %v1371 = vunpack.c.l.b16 %v372
    %v1372 = vunpack.c.h.b16 %v372
    %v1373 = vunpack.c.l.b16 %v373
    %v1374 = vunpack.c.h.b16 %v373
    %v1375 = vunpack.c.l.b16 %v374
    %v1376 = vunpack.c.h.b16 %v374
    %v1377 = vunpack.c.l.b16 %v375
    %v1378 = vunpack.c.h.b16 %v375
    %v1379 = vunpack.c.l.b16 %v376
    %v1380 = vunpack.c.h.b16 %v376
    %v1381 = vunpack.c.l.b16 %v377
    %v1382 = vunpack.c.h.b16 %v377
    %v1383 = vunpack.c.l.b16 %v378
    %v1384 = vunpack.c.h.b16 %v378
    %v1385 = vunpack.c.l.b16 %v379
    %v1386 = vunpack.c.h.b16 %v379
    %v1387 = vunpack.c.l.b16 %v380
    %v1388 = vunpack.c.h.b16 %v380
    %v1389 = vunpack.c.l.b16 %v381
    %v1390 = vunpack.c.h.b16 %v381
    %v1391 = vunpack.c.l.b16 %v382
    %v1392 = vunpack.c.h.b16 %v382
    %v1393 = vunpack.c.l.b16 %v383
    %v1394 = vunpack.c.h.b16 %v383
    %v1395 = vunpack.c.l.b16 %v384
    %v1396 = vunpack.c.h.b16 %v384
    %v1397 = vunpack.c.l.b16 %v385
    %v1398 = vunpack.c.h.b16 %v385
    %v1399 = vunpack.c.l.b16 %v386
    %v1400 = vunpack.c.h.b16 %v386
    %v1401 = vunpack.c.l.b16 %v387
    %v1402 = vunpack.c.h.b16 %v387
    %v1403 = vunpack.c.l.b16 %v388
    %v1404 = vunpack.c.h.b16 %v388
    %v1405 = vunpack.c.l.b16 %v389
    %v1406 = vunpack.c.h.b16 %v389
    %v1407 = vunpack.c.l.b16 %v390
    %v1408 = vunpack.c.h.b16 %v390
    %v1409 = vunpack.c.l.b16 %v391
    %v1410 = vunpack.c.h.b16 %v391
    %v1411 = vunpack.c.l.b16 %v392
    %v1412 = vunpack.c.h.b16 %v392
    %v1413 = vunpack.c.l.b16 %v393
    %v1414 = vunpack.c.h.b16 %v393
    %v1415 = vunpack.c.l.b16 %v394
    %v1416 = vunpack.c.h.b16 %v394
    %v1417 = vunpack.c.l.b16 %v395
    %v1418 = vunpack.c.h.b16 %v395
    %v1419 = vunpack.c.l.b16 %v396
    %v1420 = vunpack.c.h.b16 %v396
    %v1421 = vunpack.c.l.b16 %v397
    %v1422 = vunpack.c.h.b16 %v397
    %v1423 = vunpack.c.l.b16 %v398
    %v1424 = vunpack.c.h.b16 %v398
    %v1425 = vunpack.c.l.b16 %v399
    %v1426 = vunpack.c.h.b16 %v399
    %v1427 = vunpack.c.l.b16 %v400
    %v1428 = vunpack.c.h.b16 %v400
    %v1429 = vunpack.c.l.b16 %v401
    %v1430 = vunpack.c.h.b16 %v401
    %v1431 = vunpack.c.l.b16 %v402
    %v1432 = vunpack.c.h.b16 %v402
    %v1433 = vunpack.c.l.b16 %v403
    %v1434 = vunpack.c.h.b16 %v403
    %v1435 = vunpack.c.l.b16 %v404
    %v1436 = vunpack.c.h.b16 %v404
    %v1437 = vunpack.c.l.b16 %v405
    %v1438 = vunpack.c.h.b16 %v405
    %v1439 = vunpack.c.l.b16 %v406
    %v1440 = vunpack.c.h.b16 %v406
    %v1441 = vunpack.c.l.b16 %v407
    %v1442 = vunpack.c.h.b16 %v407
    %v1443 = vunpack.c.l.b16 %v408
    %v1444 = vunpack.c.h.b16 %v408
    %v1445 = vunpack.c.l.b16 %v409
    %v1446 = vunpack.c.h.b16 %v409
    %v1447 = vunpack.c.l.b16 %v410
    %v1448 = vunpack.c.h.b16 %v410
    %v1449 = vunpack.c.l.b16 %v411
    %v1450 = vunpack.c.h.b16 %v411
    %v1451 = vunpack.c.l.b16 %v412
    %v1452 = vunpack.c.h.b16 %v412
    %v1453 = vunpack.c.l.b16 %v413
    %v1454 = vunpack.c.h.b16 %v413
    %v1455 = vunpack.c.l.b16 %v414
    %v1456 = vunpack.c.h.b16 %v414
    %v1457 = vunpack.c.l.b16 %v415
    %v1458 = vunpack.c.h.b16 %v415
    %v1459 = vunpack.c.l.b16 %v416
    %v1460 = vunpack.c.h.b16 %v416
    %v1461 = vunpack.c.l.b16 %v417
    %v1462 = vunpack.c.h.b16 %v417
    %v1463 = vunpack.c.l.b16 %v418
    %v1464 = vunpack.c.h.b16 %v418
    %v1465 = vunpack.c.l.b16 %v419
    %v1466 = vunpack.c.h.b16 %v419
    %v1467 = vunpack.c.l.b16 %v420
    %v1468 = vunpack.c.h.b16 %v420
    %v1469 = vunpack.c.l.b16 %v421
    %v1470 = vunpack.c.h.b16 %v421
    %v1471 = vunpack.c.l.b16 %v422
    %v1472 = vunpack.c.h.b16 %v422
    %v1473 = vunpack.c.l.b16 %v423
    %v1474 = vunpack.c.h.b16 %v423
    %v1475 = vunpack.c.l.b16 %v424
    %v1476 = vunpack.c.h.b16 %v424
    %v1477 = vunpack.c.l.b16 %v425
    %v1478 = vunpack.c.h.b16 %v425
    %v1479 = vunpack.c.l.b16 %v426
    %v1480 = vunpack.c.h.b16 %v426
    %v1481 = vunpack.c.l.b16 %v427
    %v1482 = vunpack.c.h.b16 %v427
    %v1483 = vunpack.c.l.b16 %v428
    %v1484 = vunpack.c.h.b16 %v428
    %v1485 = vunpack.c.l.b16 %v429
    %v1486 = vunpack.c.h.b16 %v429
    %v1487 = vunpack.c.l.b16 %v430
    %v1488 = vunpack.c.h.b16 %v430
    %v1489 = vunpack.c.l.b16 %v431
    %v1490 = vunpack.c.h.b16 %v431
    %v1491 = vunpack.c.l.b16 %v432
    %v1492 = vunpack.c.h.b16 %v432
    %v1493 = vunpack.c.l.b16 %v433
    %v1494 = vunpack.c.h.b16 %v433
    %v1495 = vunpack.c.l.b16 %v434
    %v1496 = vunpack.c.h.b16 %v434
    %v1497 = vunpack.c.l.b16 %v435
    %v1498 = vunpack.c.h.b16 %v435
    %v1499 = vunpack.c.l.b16 %v436
    %v1500 = vunpack.c.h.b16 %v436
    %v1501 = vunpack.c.l.b16 %v437
    %v1502 = vunpack.c.h.b16 %v437
    %v1503 = vunpack.c.l.b16 %v438
    %v1504 = vunpack.c.h.b16 %v438
    %v1505 = vunpack.c.l.b16 %v439
    %v1506 = vunpack.c.h.b16 %v439
    %v1507 = vunpack.c.l.b16 %v440
    %v1508 = vunpack.c.h.b16 %v440
    %v1509 = vunpack.c.l.b16 %v441
    %v1510 = vunpack.c.h.b16 %v441
    %v1511 = vunpack.c.l.b16 %v442
    %v1512 = vunpack.c.h.b16 %v442
    %v1513 = vunpack.c.l.b16 %v443
    %v1514 = vunpack.c.h.b16 %v443
    %v1515 = vunpack.c.l.b16 %v444
    %v1516 = vunpack.c.h.b16 %v444
    %v1517 = vunpack.c.l.b16 %v445
    %v1518 = vunpack.c.h.b16 %v445
    %v1519 = vunpack.c.l.b16 %v446
    %v1520 = vunpack.c.h.b16 %v446
    %v1521 = vunpack.c.l.b16 %v447
    %v1522 = vunpack.c.h.b16 %v447
    %v1523 = vunpack.c.l.b16 %v448
    %v1524 = vunpack.c.h.b16 %v448
    %v1525 = vunpack.c.l.b16 %v449
    %v1526 = vunpack.c.h.b16 %v449
    %v1527 = vunpack.c.l.b16 %v450
    %v1528 = vunpack.c.h.b16 %v450
    %v1529 = vunpack.c.l.b16 %v451
    %v1530 = vunpack.c.h.b16 %v451
    %v1531 = vunpack.c.l.b16 %v452
    %v1532 = vunpack.c.h.b16 %v452
    %v1533 = vunpack.c.l.b16 %v453
    %v1534 = vunpack.c.h.b16 %v453
    %v1535 = vunpack.c.l.b16 %v454
    %v1536 = vunpack.c.h.b16 %v454
    %v1537 = vunpack.c.l.b16 %v455
    %v1538 = vunpack.c.h.b16 %v455
    %v1539 = vunpack.c.l.b16 %v456
    %v1540 = vunpack.c.h.b16 %v456
    %v1541 = vunpack.c.l.b16 %v457
    %v1542 = vunpack.c.h.b16 %v457
    %v1543 = vunpack.c.l.b16 %v458
    %v1544 = vunpack.c.h.b16 %v458
    %v1545 = vunpack.c.l.b16 %v459
    %v1546 = vunpack.c.h.b16 %v459
    %v1547 = vunpack.c.l.b16 %v460
    %v1548 = vunpack.c.h.b16 %v460
    %v1549 = vunpack.c.l.b16 %v461
    %v1550 = vunpack.c.h.b16 %v461
    %v1551 = vunpack.c.l.b16 %v462
    %v1552 = vunpack.c.h.b16 %v462
    %v1553 = vunpack.c.l.b16 %v463
    %v1554 = vunpack.c.h.b16 %v463
    %v1555 = vunpack.c.l.b16 %v464
    %v1556 = vunpack.c.h.b16 %v464
    %v1557 = vunpack.c.l.b16 %v465
    %v1558 = vunpack.c.h.b16 %v465
    %v1559 = vunpack.c.l.b16 %v466
    %v1560 = vunpack.c.h.b16 %v466
    %v1561 = vunpack.c.l.b16 %v467
    %v1562 = vunpack.c.h.b16 %v467
    %v1563 = vunpack.c.l.b16 %v468
    %v1564 = vunpack.c.h.b16 %v468
    %v1565 = vunpack.c.l.b16 %v469
    %v1566 = vunpack.c.h.b16 %v469
    %v1567 = vunpack.c.l.b16 %v470
    %v1568 = vunpack.c.h.b16 %v470
    %v1569 = vunpack.c.l.b16 %v471
    %v1570 = vunpack.c.h.b16 %v471
    %v1571 = vunpack.c.l.b16 %v472
    %v1572 = vunpack.c.h.b16 %v472
    %v1573 = vunpack.c.l.b16 %v473
    %v1574 = vunpack.c.h.b16 %v473
    %v1575 = vunpack.c.l.b16 %v474
    %v1576 = vunpack.c.h.b16 %v474
    %v1577 = vunpack.c.l.b16 %v475
    %v1578 = vunpack.c.h.b16 %v475
    %v1579 = vunpack.c.l.b16 %v476
    %v1580 = vunpack.c.h.b16 %v476
    %v1581 = vunpack.c.l.b16 %v477
    %v1582 = vunpack.c.h.b16 %v477
    %v1583 = vunpack.c.l.b16 %v478
    %v1584 = vunpack.c.h.b16 %v478
    %v1585 = vunpack.c.l.b16 %v479
    %v1586 = vunpack.c.h.b16 %v479
    %v1587 = vunpack.c.l.b16 %v480
    %v1588 = vunpack.c.h.b16 %v480
    %v1589 = vunpack.c.l.b16 %v481
    %v1590 = vunpack.c.h.b16 %v481
    %v1591 = vunpack.c.l.b16 %v482
    %v1592 = vunpack.c.h.b16 %v482
    %v1593 = vunpack.c.l.b16 %v483
    %v1594 = vunpack.c.h.b16 %v483
    %v1595 = vunpack.c.l.b16 %v484
    %v1596 = vunpack.c.h.b16 %v484
    %v1597 = vunpack.c.l.b16 %v485
    %v1598 = vunpack.c.h.b16 %v485
    %v1599 = vunpack.c.l.b16 %v486
    %v1600 = vunpack.c.h.b16 %v486
    %v1601 = vunpack.c.l.b16 %v487
    %v1602 = vunpack.c.h.b16 %v487
    %v1603 = vunpack.c.l.b16 %v488
    %v1604 = vunpack.c.h.b16 %v488
    %v1605 = vunpack.c.l.b16 %v489
    %v1606 = vunpack.c.h.b16 %v489
    %v1607 = vunpack.c.l.b16 %v490
    %v1608 = vunpack.c.h.b16 %v490
    %v1609 = vunpack.c.l.b16 %v491
    %v1610 = vunpack.c.h.b16 %v491
    %v1611 = vunpack.c.l.b16 %v492
    %v1612 = vunpack.c.h.b16 %v492
    %v1613 = vunpack.c.l.b16 %v493
    %v1614 = vunpack.c.h.b16 %v493
    %v1615 = vunpack.c.l.b16 %v494
    %v1616 = vunpack.c.h.b16 %v494
    %v1617 = vunpack.c.l.b16 %v495
    %v1618 = vunpack.c.h.b16 %v495
    %v1619 = vunpack.c.l.b16 %v496
    %v1620 = vunpack.c.h.b16 %v496
    %v1621 = vunpack.c.l.b16 %v497
    %v1622 = vunpack.c.h.b16 %v497
    %v1623 = vunpack.c.l.b16 %v498
    %v1624 = vunpack.c.h.b16 %v498
    %v1625 = vunpack.c.l.b16 %v499
    %v1626 = vunpack.c.h.b16 %v499
    %v1627 = vunpack.c.l.b16 %v500
    %v1628 = vunpack.c.h.b16 %v500
    %v1629 = vunpack.c.l.b16 %v501
    %v1630 = vunpack.c.h.b16 %v501
    %v1631 = vunpack.c.l.b16 %v502
    %v1632 = vunpack.c.h.b16 %v502
    %v1633 = vunpack.c.l.b16 %v503
    %v1634 = vunpack.c.h.b16 %v503
    %v1635 = vunpack.c.l.b16 %v504
    %v1636 = vunpack.c.h.b16 %v504
    %v1637 = vunpack.c.l.b16 %v505
    %v1638 = vunpack.c.h.b16 %v505
    %v1639 = vunpack.c.l.b16 %v506
    %v1640 = vunpack.c.h.b16 %v506
    %v1641 = vunpack.c.l.b16 %v507
    %v1642 = vunpack.c.h.b16 %v507
    %v1643 = vunpack.c.l.b16 %v508
    %v1644 = vunpack.c.h.b16 %v508
    %v1645 = vunpack.c.l.b16 %v509
    %v1646 = vunpack.c.h.b16 %v509
    %v1647 = vunpack.c.l.b16 %v510
    %v1648 = vunpack.c.h.b16 %v510
    %v1649 = vunpack.c.l.b16 %v511
    %v1650 = vunpack.c.h.b16 %v511
    %v1651 = vunpack.c.l.b16 %v512
    %v1652 = vunpack.c.h.b16 %v512
    %v1653 = vunpack.c.l.b16 %v513
    %v1654 = vunpack.c.h.b16 %v513
    %v1655 = vunpack.c.l.b16 %v514
    %v1656 = vunpack.c.h.b16 %v514
    %v1657 = vunpack.c.l.b16 %v515
    %v1658 = vunpack.c.h.b16 %v515
    %v1659 = vunpack.c.l.b16 %v516
    %v1660 = vunpack.c.h.b16 %v516
    %v1661 = vunpack.c.l.b16 %v517
    %v1662 = vunpack.c.h.b16 %v517
    %v1663 = vunpack.c.l.b16 %v518
    %v1664 = vunpack.c.h.b16 %v518
    %v1665 = vunpack.c.l.b16 %v519
    %v1666 = vunpack.c.h.b16 %v519
    %v1667 = vunpack.c.l.b16 %v520
    %v1668 = vunpack.c.h.b16 %v520
    %v1669 = vunpack.c.l.b16 %v521
    %v1670 = vunpack.c.h.b16 %v521
    %v1671 = vunpack.c.l.b16 %v522
    %v1672 = vunpack.c.h.b16 %v522
    %v1673 = vunpack.c.l.b16 %v523
    %v1674 = vunpack.c.h.b16 %v523
    %v1675 = vunpack.c.l.b16 %v524
    %v1676 = vunpack.c.h.b16 %v524
    %v1677 = vunpack.c.l.b16 %v525
    %v1678 = vunpack.c.h.b16 %v525
    %v1679 = vunpack.c.l.b16 %v526
    %v1680 = vunpack.c.h.b16 %v526
    %v1681 = vunpack.c.l.b16 %v527
    %v1682 = vunpack.c.h.b16 %v527
    %v1683 = vunpack.c.l.b16 %v528
    %v1684 = vunpack.c.h.b16 %v528
    %v1685 = vunpack.c.l.b16 %v529
    %v1686 = vunpack.c.h.b16 %v529
    %v1687 = vunpack.c.l.b16 %v530
    %v1688 = vunpack.c.h.b16 %v530
    %v1689 = vunpack.c.l.b16 %v531
    %v1690 = vunpack.c.h.b16 %v531
    %v1691 = vunpack.c.l.b16 %v532
    %v1692 = vunpack.c.h.b16 %v532
    %v1693 = vunpack.c.l.b16 %v533
    %v1694 = vunpack.c.h.b16 %v533
    %v1695 = vunpack.c.l.b16 %v534
    %v1696 = vunpack.c.h.b16 %v534
    %v1697 = vunpack.c.l.b16 %v535
    %v1698 = vunpack.c.h.b16 %v535
    %v1699 = vunpack.c.l.b16 %v536
    %v1700 = vunpack.c.h.b16 %v536
    %v1701 = vunpack.c.l.b16 %v537
    %v1702 = vunpack.c.h.b16 %v537
    %v1703 = vunpack.c.l.b16 %v538
    %v1704 = vunpack.c.h.b16 %v538
    %v1705 = vunpack.c.l.b16 %v539
    %v1706 = vunpack.c.h.b16 %v539
    %v1707 = vunpack.c.l.b16 %v540
    %v1708 = vunpack.c.h.b16 %v540
    %v1709 = vunpack.c.l.b16 %v541
    %v1710 = vunpack.c.h.b16 %v541
    %v1711 = vunpack.c.l.b16 %v542
    %v1712 = vunpack.c.h.b16 %v542
    %v1713 = vunpack.c.l.b16 %v543
    %v1714 = vunpack.c.h.b16 %v543
    %v1715 = vunpack.c.l.b16 %v544
    %v1716 = vunpack.c.h.b16 %v544
    %v1717 = vunpack.c.l.b16 %v545
    %v1718 = vunpack.c.h.b16 %v545
    %v1719 = vunpack.c.l.b16 %v546
    %v1720 = vunpack.c.h.b16 %v546
    %v1721 = vunpack.c.l.b16 %v547
    %v1722 = vunpack.c.h.b16 %v547
    %v1723 = vunpack.c.l.b16 %v548
    %v1724 = vunpack.c.h.b16 %v548
    %v1725 = vunpack.c.l.b16 %v549
    %v1726 = vunpack.c.h.b16 %v549
    %v1727 = vunpack.c.l.b16 %v550
    %v1728 = vunpack.c.h.b16 %v550
    %v1729 = vunpack.c.l.b16 %v551
    %v1730 = vunpack.c.h.b16 %v551
    %v1731 = vunpack.c.l.b16 %v552
    %v1732 = vunpack.c.h.b16 %v552
    %v1733 = vunpack.c.l.b16 %v553
    %v1734 = vunpack.c.h.b16 %v553
    %v1735 = vunpack.c.l.b16 %v554
    %v1736 = vunpack.c.h.b16 %v554
    %v1737 = vunpack.c.l.b16 %v555
    %v1738 = vunpack.c.h.b16 %v555
    %v1739 = vunpack.c.l.b16 %v556
    %v1740 = vunpack.c.h.b16 %v556
    %v1741 = vunpack.c.l.b16 %v557
    %v1742 = vunpack.c.h.b16 %v557
    %v1743 = vunpack.c.l.b16 %v558
    %v1744 = vunpack.c.h.b16 %v558
    %v1745 = vunpack.c.l.b16 %v559
    %v1746 = vunpack.c.h.b16 %v559
    %v1747 = vunpack.c.l.b16 %v560
    %v1748 = vunpack.c.h.b16 %v560
    %v1749 = vunpack.c.l.b16 %v561
    %v1750 = vunpack.c.h.b16 %v561
    %v1751 = vunpack.c.l.b16 %v562
    %v1752 = vunpack.c.h.b16 %v562
    %v1753 = vunpack.c.l.b16 %v563
    %v1754 = vunpack.c.h.b16 %v563
    %v1755 = vunpack.c.l.b16 %v564
    %v1756 = vunpack.c.h.b16 %v564
    %v1757 = vunpack.c.l.b16 %v565
    %v1758 = vunpack.c.h.b16 %v565
    %v1759 = vunpack.c.l.b16 %v566
    %v1760 = vunpack.c.h.b16 %v566
    %v1761 = vunpack.c.l.b16 %v567
    %v1762 = vunpack.c.h.b16 %v567
    %v1763 = vunpack.c.l.b16 %v568
    %v1764 = vunpack.c.h.b16 %v568
    %v1765 = vunpack.c.l.b16 %v569
    %v1766 = vunpack.c.h.b16 %v569
    %v1767 = vunpack.c.l.b16 %v570
    %v1768 = vunpack.c.h.b16 %v570
    %v1769 = vunpack.c.l.b16 %v571
    %v1770 = vunpack.c.h.b16 %v571
    %v1771 = vunpack.c.l.b16 %v572
    %v1772 = vunpack.c.h.b16 %v572
    %v1773 = vpack.c.b16 %v975, %v973
    %v1774 = vpack.c.b16 %v976, %v974
    %v1775 = vpack.c.b16 %v979, %v977
    %v1776 = vpack.c.b16 %v980, %v978
    %v1777 = vpack.c.b16 %v983, %v981
    %v1778 = vpack.c.b16 %v984, %v982
    %v1779 = vpack.c.b16 %v987, %v985
    %v1780 = vpack.c.b16 %v988, %v986
    %v1781 = vpack.c.b16 %v991, %v989
    %v1782 = vpack.c.b16 %v992, %v990
    %v1783 = vpack.c.b16 %v995, %v993
    %v1784 = vpack.c.b16 %v996, %v994
    %v1785 = vpack.c.b16 %v999, %v997
    %v1786 = vpack.c.b16 %v1000, %v998
    %v1787 = vpack.c.b16 %v1003, %v1001
    %v1788 = vpack.c.b16 %v1004, %v1002
    %v1789 = vpack.c.b16 %v1007, %v1005
    %v1790 = vpack.c.b16 %v1008, %v1006
    %v1791 = vpack.c.b16 %v1011, %v1009
    %v1792 = vpack.c.b16 %v1012, %v1010
    %v1793 = vpack.c.b16 %v1015, %v1013
    %v1794 = vpack.c.b16 %v1016, %v1014
    %v1795 = vpack.c.b16 %v1019, %v1017
    %v1796 = vpack.c.b16 %v1020, %v1018
    %v1797 = vpack.c.b16 %v1023, %v1021
    %v1798 = vpack.c.b16 %v1024, %v1022
    %v1799 = vpack.c.b16 %v1027, %v1025
    %v1800 = vpack.c.b16 %v1028, %v1026
    %v1801 = vpack.c.b16 %v1031, %v1029
    %v1802 = vpack.c.b16 %v1032, %v1030
    %v1803 = vpack.c.b16 %v1035, %v1033
    %v1804 = vpack.c.b16 %v1036, %v1034
    %v1805 = vpack.c.b16 %v1039, %v1037
    %v1806 = vpack.c.b16 %v1040, %v1038
    %v1807 = vpack.c.b16 %v1043, %v1041
    %v1808 = vpack.c.b16 %v1044, %v1042
    %v1809 = vpack.c.b16 %v1047, %v1045
    %v1810 = vpack.c.b16 %v1048, %v1046
    %v1811 = vpack.c.b16 %v1051, %v1049
    %v1812 = vpack.c.b16 %v1052, %v1050
    %v1813 = vpack.c.b16 %v1055, %v1053
    %v1814 = vpack.c.b16 %v1056, %v1054
    %v1815 = vpack.c.b16 %v1059, %v1057
    %v1816 = vpack.c.b16 %v1060, %v1058
    %v1817 = vpack.c.b16 %v1063, %v1061
    %v1818 = vpack.c.b16 %v1064, %v1062
    %v1819 = vpack.c.b16 %v1067, %v1065
    %v1820 = vpack.c.b16 %v1068, %v1066
    %v1821 = vpack.c.b16 %v1071, %v1069
    %v1822 = vpack.c.b16 %v1072, %v1070
    %v1823 = vpack.c.b16 %v1075, %v1073
    %v1824 = vpack.c.b16 %v1076, %v1074
    %v1825 = vpack.c.b16 %v1079, %v1077
    %v1826 = vpack.c.b16 %v1080, %v1078
    %v1827 = vpack.c.b16 %v1083, %v1081
    %v1828 = vpack.c.b16 %v1084, %v1082
    %v1829 = vpack.c.b16 %v1087, %v1085
    %v1830 = vpack.c.b16 %v1088, %v1086
    %v1831 = vpack.c.b16 %v1091, %v1089
    %v1832 = vpack.c.b16 %v1092, %v1090
    %v1833 = vpack.c.b16 %v1095, %v1093
    %v1834 = vpack.c.b16 %v1096, %v1094
    %v1835 = vpack.c.b16 %v1099, %v1097
    %v1836 = vpack.c.b16 %v1100, %v1098
    %v1837 = vpack.c.b16 %v1103, %v1101
    %v1838 = vpack.c.b16 %v1104, %v1102
    %v1839 = vpack.c.b16 %v1107, %v1105
    %v1840 = vpack.c.b16 %v1108, %v1106
    %v1841 = vpack.c.b16 %v1111, %v1109
    %v1842 = vpack.c.b16 %v1112, %v1110
    %v1843 = vpack.c.b16 %v1115, %v1113
    %v1844 = vpack.c.b16 %v1116, %v1114
    %v1845 = vpack.c.b16 %v1119, %v1117
    %v1846 = vpack.c.b16 %v1120, %v1118
    %v1847 = vpack.c.b16 %v1123, %v1121
    %v1848 = vpack.c.b16 %v1124, %v1122
    %v1849 = vpack.c.b16 %v1127, %v1125
    %v1850 = vpack.c.b16 %v1128, %v1126
    %v1851 = vpack.c.b16 %v1131, %v1129
    %v1852 = vpack.c.b16 %v1132, %v1130
    %v1853 = vpack.c.b16 %v1135, %v1133
    %v1854 = vpack.c.b16 %v1136, %v1134
    %v1855 = vpack.c.b16 %v1139, %v1137
    %v1856 = vpack.c.b16 %v1140, %v1138
    %v1857 = vpack.c.b16 %v1143, %v1141
    %v1858 = vpack.c.b16 %v1144, %v1142
    %v1859 = vpack.c.b16 %v1147, %v1145
    %v1860 = vpack.c.b16 %v1148, %v1146
    %v1861 = vpack.c.b16 %v1151, %v1149
    %v1862 = vpack.c.b16 %v1152, %v1150
    %v1863 = vpack.c.b16 %v1155, %v1153
    %v1864 = vpack.c.b16 %v1156, %v1154
    %v1865 = vpack.c.b16 %v1159, %v1157
    %v1866 = vpack.c.b16 %v1160, %v1158
    %v1867 = vpack.c.b16 %v1163, %v1161
    %v1868 = vpack.c.b16 %v1164, %v1162
    %v1869 = vpack.c.b16 %v1167, %v1165
    %v1870 = vpack.c.b16 %v1168, %v1166
    %v1871 = vpack.c.b16 %v1171, %v1169
    %v1872 = vpack.c.b16 %v1172, %v1170
    %v1873 = vpack.c.b16 %v1175, %v1173
    %v1874 = vpack.c.b16 %v1176, %v1174
    %v1875 = vpack.c.b16 %v1179, %v1177
    %v1876 = vpack.c.b16 %v1180, %v1178
    %v1877 = vpack.c.b16 %v1183, %v1181
    %v1878 = vpack.c.b16 %v1184, %v1182
    %v1879 = vpack.c.b16 %v1187, %v1185
    %v1880 = vpack.c.b16 %v1188, %v1186
    %v1881 = vpack.c.b16 %v1191, %v1189
    %v1882 = vpack.c.b16 %v1192, %v1190
    %v1883 = vpack.c.b16 %v1195, %v1193
    %v1884 = vpack.c.b16 %v1196, %v1194
    %v1885 = vpack.c.b16 %v1199, %v1197
    %v1886 = vpack.c.b16 %v1200, %v1198
    %v1887 = vpack.c.b16 %v1203, %v1201
    %v1888 = vpack.c.b16 %v1204, %v1202
    %v1889 = vpack.c.b16 %v1207, %v1205
    %v1890 = vpack.c.b16 %v1208, %v1206
    %v1891 = vpack.c.b16 %v1211, %v1209
    %v1892 = vpack.c.b16 %v1212, %v1210
    %v1893 = vpack.c.b16 %v1215, %v1213
    %v1894 = vpack.c.b16 %v1216, %v1214
    %v1895 = vpack.c.b16 %v1219, %v1217
    %v1896 = vpack.c.b16 %v1220, %v1218
    %v1897 = vpack.c.b16 %v1223, %v1221
    %v1898 = vpack.c.b16 %v1224, %v1222
    %v1899 = vpack.c.b16 %v1227, %v1225
    %v1900 = vpack.c.b16 %v1228, %v1226
    %v1901 = vpack.c.b16 %v1231, %v1229
    %v1902 = vpack.c.b16 %v1232, %v1230
    %v1903 = vpack.c.b16 %v1235, %v1233
    %v1904 = vpack.c.b16 %v1236, %v1234
    %v1905 = vpack.c.b16 %v1239, %v1237
    %v1906 = vpack.c.b16 %v1240, %v1238
    %v1907 = vpack.c.b16 %v1243, %v1241
    %v1908 = vpack.c.b16 %v1244, %v1242
    %v1909 = vpack.c.b16 %v1247, %v1245
    %v1910 = vpack.c.b16 %v1248, %v1246
    %v1911 = vpack.c.b16 %v1251, %v1249
    %v1912 = vpack.c.b16 %v1252, %v1250
    %v1913 = vpack.c.b16 %v1255, %v1253
    %v1914 = vpack.c.b16 %v1256, %v1254
    %v1915 = vpack.c.b16 %v1259, %v1257
    %v1916 = vpack.c.b16 %v1260, %v1258
    %v1917 = vpack.c.b16 %v1263, %v1261
    %v1918 = vpack.c.b16 %v1264, %v1262
    %v1919 = vpack.c.b16 %v1267, %v1265
    %v1920 = vpack.c.b16 %v1268, %v1266
    %v1921 = vpack.c.b16 %v1271, %v1269
    %v1922 = vpack.c.b16 %v1272, %v1270
    %v1923 = vpack.c.b16 %v1275, %v1273
    %v1924 = vpack.c.b16 %v1276, %v1274
    %v1925 = vpack.c.b16 %v1279, %v1277
    %v1926 = vpack.c.b16 %v1280, %v1278
    %v1927 = vpack.c.b16 %v1283, %v1281
    %v1928 = vpack.c.b16 %v1284, %v1282
    %v1929 = vpack.c.b16 %v1287, %v1285
    %v1930 = vpack.c.b16 %v1288, %v1286
    %v1931 = vpack.c.b16 %v1291, %v1289
    %v1932 = vpack.c.b16 %v1292, %v1290
    %v1933 = vpack.c.b16 %v1295, %v1293
    %v1934 = vpack.c.b16 %v1296, %v1294
    %v1935 = vpack.c.b16 %v1299, %v1297
    %v1936 = vpack.c.b16 %v1300, %v1298
    %v1937 = vpack.c.b16 %v1303, %v1301
    %v1938 = vpack.c.b16 %v1304, %v1302
    %v1939 = vpack.c.b16 %v1307, %v1305
    %v1940 = vpack.c.b16 %v1308, %v1306
    %v1941 = vpack.c.b16 %v1311, %v1309
    %v1942 = vpack.c.b16 %v1312, %v1310
    %v1943 = vpack.c.b16 %v1315, %v1313
    %v1944 = vpack.c.b16 %v1316, %v1314
    %v1945 = vpack.c.b16 %v1319, %v1317
    %v1946 = vpack.c.b16 %v1320, %v1318
    %v1947 = vpack.c.b16 %v1323, %v1321
    %v1948 = vpack.c.b16 %v1324, %v1322
    %v1949 = vpack.c.b16 %v1327, %v1325
    %v1950 = vpack.c.b16 %v1328, %v1326
    %v1951 = vpack.c.b16 %v1331, %v1329
    %v1952 = vpack.c.b16 %v1332, %v1330
    %v1953 = vpack.c.b16 %v1335, %v1333
    %v1954 = vpack.c.b16 %v1336, %v1334
    %v1955 = vpack.c.b16 %v1339, %v1337
    %v1956 = vpack.c.b16 %v1340, %v1338
    %v1957 = vpack.c.b16 %v1343, %v1341
    %v1958 = vpack.c.b16 %v1344, %v1342
    %v1959 = vpack.c.b16 %v1347, %v1345
    %v1960 = vpack.c.b16 %v1348, %v1346
    %v1961 = vpack.c.b16 %v1351, %v1349
    %v1962 = vpack.c.b16 %v1352, %v1350
    %v1963 = vpack.c.b16 %v1355, %v1353
    %v1964 = vpack.c.b16 %v1356, %v1354
    %v1965 = vpack.c.b16 %v1359, %v1357
    %v1966 = vpack.c.b16 %v1360, %v1358
    %v1967 = vpack.c.b16 %v1363, %v1361
    %v1968 = vpack.c.b16 %v1364, %v1362
    %v1969 = vpack.c.b16 %v1367, %v1365
    %v1970 = vpack.c.b16 %v1368, %v1366
    %v1971 = vpack.c.b16 %v1371, %v1369
    %v1972 = vpack.c.b16 %v1372, %v1370
    %v1973 = vpack.c.b16 %v1375, %v1373
    %v1974 = vpack.c.b16 %v1376, %v1374
    %v1975 = vpack.c.b16 %v1379, %v1377
    %v1976 = vpack.c.b16 %v1380, %v1378
    %v1977 = vpack.c.b16 %v1383, %v1381
    %v1978 = vpack.c.b16 %v1384, %v1382
    %v1979 = vpack.c.b16 %v1387, %v1385
    %v1980 = vpack.c.b16 %v1388, %v1386
    %v1981 = vpack.c.b16 %v1391, %v1389
    %v1982 = vpack.c.b16 %v1392, %v1390
    %v1983 = vpack.c.b16 %v1395, %v1393
    %v1984 = vpack.c.b16 %v1396, %v1394
    %v1985 = vpack.c.b16 %v1399, %v1397
    %v1986 = vpack.c.b16 %v1400, %v1398
    %v1987 = vpack.c.b16 %v1403, %v1401
    %v1988 = vpack.c.b16 %v1404, %v1402
    %v1989 = vpack.c.b16 %v1407, %v1405
    %v1990 = vpack.c.b16 %v1408, %v1406
    %v1991 = vpack.c.b16 %v1411, %v1409
    %v1992 = vpack.c.b16 %v1412, %v1410
    %v1993 = vpack.c.b16 %v1415, %v1413
    %v1994 = vpack.c.b16 %v1416, %v1414
    %v1995 = vpack.c.b16 %v1419, %v1417
    %v1996 = vpack.c.b16 %v1420, %v1418
    %v1997 = vpack.c.b16 %v1423, %v1421
    %v1998 = vpack.c.b16 %v1424, %v1422
    %v1999 = vpack.c.b16 %v1427, %v1425
    %v2000 = vpack.c.b16 %v1428, %v1426
    %v2001 = vpack.c.b16 %v1431, %v1429
    %v2002 = vpack.c.b16 %v1432, %v1430
    %v2003 = vpack.c.b16 %v1435, %v1433
    %v2004 = vpack.c.b16 %v1436, %v1434
    %v2005 = vpack.c.b16 %v1439, %v1437
    %v2006 = vpack.c.b16 %v1440, %v1438
    %v2007 = vpack.c.b16 %v1443, %v1441
    %v2008 = vpack.c.b16 %v1444, %v1442
    %v2009 = vpack.c.b16 %v1447, %v1445
    %v2010 = vpack.c.b16 %v1448, %v1446
    %v2011 = vpack.c.b16 %v1451, %v1449
    %v2012 = vpack.c.b16 %v1452, %v1450
    %v2013 = vpack.c.b16 %v1455, %v1453
    %v2014 = vpack.c.b16 %v1456, %v1454
    %v2015 = vpack.c.b16 %v1459, %v1457
    %v2016 = vpack.c.b16 %v1460, %v1458
    %v2017 = vpack.c.b16 %v1463, %v1461
    %v2018 = vpack.c.b16 %v1464, %v1462
    %v2019 = vpack.c.b16 %v1467, %v1465
    %v2020 = vpack.c.b16 %v1468, %v1466
    %v2021 = vpack.c.b16 %v1471, %v1469
    %v2022 = vpack.c.b16 %v1472, %v1470
    %v2023 = vpack.c.b16 %v1475, %v1473
    %v2024 = vpack.c.b16 %v1476, %v1474
    %v2025 = vpack.c.b16 %v1479, %v1477
    %v2026 = vpack.c.b16 %v1480, %v1478
    %v2027 = vpack.c.b16 %v1483, %v1481
    %v2028 = vpack.c.b16 %v1484, %v1482
    %v2029 = vpack.c.b16 %v1487, %v1485
    %v2030 = vpack.c.b16 %v1488, %v1486
    %v2031 = vpack.c.b16 %v1491, %v1489
    %v2032 = vpack.c.b16 %v1492, %v1490
    %v2033 = vpack.c.b16 %v1495, %v1493
    %v2034 = vpack.c.b16 %v1496, %v1494
    %v2035 = vpack.c.b16 %v1499, %v1497
    %v2036 = vpack.c.b16 %v1500, %v1498
    %v2037 = vpack.c.b16 %v1503, %v1501
    %v2038 = vpack.c.b16 %v1504, %v1502
    %v2039 = vpack.c.b16 %v1507, %v1505
    %v2040 = vpack.c.b16 %v1508, %v1506
    %v2041 = vpack.c.b16 %v1511, %v1509
    %v2042 = vpack.c.b16 %v1512, %v1510
    %v2043 = vpack.c.b16 %v1515, %v1513
    %v2044 = vpack.c.b16 %v1516, %v1514
    %v2045 = vpack.c.b16 %v1519, %v1517
    %v2046 = vpack.c.b16 %v1520, %v1518
    %v2047 = vpack.c.b16 %v1523, %v1521
    %v2048 = vpack.c.b16 %v1524, %v1522
    %v2049 = vpack.c.b16 %v1527, %v1525
    %v2050 = vpack.c.b16 %v1528, %v1526
    %v2051 = vpack.c.b16 %v1531, %v1529
    %v2052 = vpack.c.b16 %v1532, %v1530
    %v2053 = vpack.c.b16 %v1535, %v1533
    %v2054 = vpack.c.b16 %v1536, %v1534
    %v2055 = vpack.c.b16 %v1539, %v1537
    %v2056 = vpack.c.b16 %v1540, %v1538
    %v2057 = vpack.c.b16 %v1543, %v1541
    %v2058 = vpack.c.b16 %v1544, %v1542
    %v2059 = vpack.c.b16 %v1547, %v1545
    %v2060 = vpack.c.b16 %v1548, %v1546
    %v2061 = vpack.c.b16 %v1551, %v1549
    %v2062 = vpack.c.b16 %v1552, %v1550
    %v2063 = vpack.c.b16 %v1555, %v1553
    %v2064 = vpack.c.b16 %v1556, %v1554
    %v2065 = vpack.c.b16 %v1559, %v1557
    %v2066 = vpack.c.b16 %v1560, %v1558
    %v2067 = vpack.c.b16 %v1563, %v1561
    %v2068 = vpack.c.b16 %v1564, %v1562
    %v2069 = vpack.c.b16 %v1567, %v1565
    %v2070 = vpack.c.b16 %v1568, %v1566
    %v2071 = vpack.c.b16 %v1571, %v1569
    %v2072 = vpack.c.b16 %v1572, %v1570
    %v2073 = vpack.c.b16 %v1575, %v1573
    %v2074 = vpack.c.b16 %v1576, %v1574
    %v2075 = vpack.c.b16 %v1579, %v1577
    %v2076 = vpack.c.b16 %v1580, %v1578
    %v2077 = vpack.c.b16 %v1583, %v1581
    %v2078 = vpack.c.b16 %v1584, %v1582
    %v2079 = vpack.c.b16 %v1587, %v1585
    %v2080 = vpack.c.b16 %v1588, %v1586
    %v2081 = vpack.c.b16 %v1591, %v1589
    %v2082 = vpack.c.b16 %v1592, %v1590
    %v2083 = vpack.c.b16 %v1595, %v1593
    %v2084 = vpack.c.b16 %v1596, %v1594
    %v2085 = vpack.c.b16 %v1599, %v1597
    %v2086 = vpack.c.b16 %v1600, %v1598
    %v2087 = vpack.c.b16 %v1603, %v1601
    %v2088 = vpack.c.b16 %v1604, %v1602
    %v2089 = vpack.c.b16 %v1607, %v1605
    %v2090 = vpack.c.b16 %v1608, %v1606
    %v2091 = vpack.c.b16 %v1611, %v1609
    %v2092 = vpack.c.b16 %v1612, %v1610
    %v2093 = vpack.c.b16 %v1615, %v1613
    %v2094 = vpack.c.b16 %v1616, %v1614
    %v2095 = vpack.c.b16 %v1619, %v1617
    %v2096 = vpack.c.b16 %v1620, %v1618
    %v2097 = vpack.c.b16 %v1623, %v1621
    %v2098 = vpack.c.b16 %v1624, %v1622
    %v2099 = vpack.c.b16 %v1627, %v1625
    %v2100 = vpack.c.b16 %v1628, %v1626
    %v2101 = vpack.c.b16 %v1631, %v1629
    %v2102 = vpack.c.b16 %v1632, %v1630
    %v2103 = vpack.c.b16 %v1635, %v1633
    %v2104 = vpack.c.b16 %v1636, %v1634
    %v2105 = vpack.c.b16 %v1639, %v1637
    %v2106 = vpack.c.b16 %v1640, %v1638
    %v2107 = vpack.c.b16 %v1643, %v1641
    %v2108 = vpack.c.b16 %v1644, %v1642
    %v2109 = vpack.c.b16 %v1647, %v1645
    %v2110 = vpack.c.b16 %v1648, %v1646
    %v2111 = vpack.c.b16 %v1651, %v1649
    %v2112 = vpack.c.b16 %v1652, %v1650
    %v2113 = vpack.c.b16 %v1655, %v1653
    %v2114 = vpack.c.b16 %v1656, %v1654
    %v2115 = vpack.c.b16 %v1659, %v1657
    %v2116 = vpack.c.b16 %v1660, %v1658
    %v2117 = vpack.c.b16 %v1663, %v1661
    %v2118 = vpack.c.b16 %v1664, %v1662
    %v2119 = vpack.c.b16 %v1667, %v1665
    %v2120 = vpack.c.b16 %v1668, %v1666
    %v2121 = vpack.c.b16 %v1671, %v1669
    %v2122 = vpack.c.b16 %v1672, %v1670
    %v2123 = vpack.c.b16 %v1675, %v1673
    %v2124 = vpack.c.b16 %v1676, %v1674
    %v2125 = vpack.c.b16 %v1679, %v1677
    %v2126 = vpack.c.b16 %v1680, %v1678
    %v2127 = vpack.c.b16 %v1683, %v1681
    %v2128 = vpack.c.b16 %v1684, %v1682
    %v2129 = vpack.c.b16 %v1687, %v1685
    %v2130 = vpack.c.b16 %v1688, %v1686
    %v2131 = vpack.c.b16 %v1691, %v1689
    %v2132 = vpack.c.b16 %v1692, %v1690
    %v2133 = vpack.c.b16 %v1695, %v1693
    %v2134 = vpack.c.b16 %v1696, %v1694
    %v2135 = vpack.c.b16 %v1699, %v1697
    %v2136 = vpack.c.b16 %v1700, %v1698
    %v2137 = vpack.c.b16 %v1703, %v1701
    %v2138 = vpack.c.b16 %v1704, %v1702
    %v2139 = vpack.c.b16 %v1707, %v1705
    %v2140 = vpack.c.b16 %v1708, %v1706
    %v2141 = vpack.c.b16 %v1711, %v1709
    %v2142 = vpack.c.b16 %v1712, %v1710
    %v2143 = vpack.c.b16 %v1715, %v1713
    %v2144 = vpack.c.b16 %v1716, %v1714
    %v2145 = vpack.c.b16 %v1719, %v1717
    %v2146 = vpack.c.b16 %v1720, %v1718
    %v2147 = vpack.c.b16 %v1723, %v1721
    %v2148 = vpack.c.b16 %v1724, %v1722
    %v2149 = vpack.c.b16 %v1727, %v1725
    %v2150 = vpack.c.b16 %v1728, %v1726
    %v2151 = vpack.c.b16 %v1731, %v1729
    %v2152 = vpack.c.b16 %v1732, %v1730
    %v2153 = vpack.c.b16 %v1735, %v1733
    %v2154 = vpack.c.b16 %v1736, %v1734
    %v2155 = vpack.c.b16 %v1739, %v1737
    %v2156 = vpack.c.b16 %v1740, %v1738
    %v2157 = vpack.c.b16 %v1743, %v1741
    %v2158 = vpack.c.b16 %v1744, %v1742
    %v2159 = vpack.c.b16 %v1747, %v1745
    %v2160 = vpack.c.b16 %v1748, %v1746
    %v2161 = vpack.c.b16 %v1751, %v1749
    %v2162 = vpack.c.b16 %v1752, %v1750
    %v2163 = vpack.c.b16 %v1755, %v1753
    %v2164 = vpack.c.b16 %v1756, %v1754
    %v2165 = vpack.c.b16 %v1759, %v1757
    %v2166 = vpack.c.b16 %v1760, %v1758
    %v2167 = vpack.c.b16 %v1763, %v1761
    %v2168 = vpack.c.b16 %v1764, %v1762
    %v2169 = vpack.c.b16 %v1767, %v1765
    %v2170 = vpack.c.b16 %v1768, %v1766
    %v2171 = vpack.c.b16 %v1771, %v1769
    %v2172 = vpack.c.b16 %v1772, %v1770
    %2573 = vmatprep.subr.bf16.mxu0 %v1774
    %2574 = vmatpush1.bf16.msra.mxu0 %v1773
    %2575 = vmatprep.subr.bf16.mxu0 %v1776
    %2576 = vmatpush1.bf16.msra.mxu0 %v1775
    %2577 = vmatprep.subr.bf16.mxu0 %v1778
    %2578 = vmatpush1.bf16.msra.mxu0 %v1777
    %2579 = vmatprep.subr.bf16.mxu0 %v1780
    %2580 = vmatpush1.bf16.msra.mxu0 %v1779
    %2581 = vmatprep.subr.bf16.mxu0 %v1782
    %2582 = vmatpush1.bf16.msra.mxu0 %v1781
    %2583 = vmatprep.subr.bf16.mxu0 %v1784
    %2584 = vmatpush1.bf16.msra.mxu0 %v1783
    %2585 = vmatprep.subr.bf16.mxu0 %v1786
    %2586 = vmatpush1.bf16.msra.mxu0 %v1785
    %2587 = vmatprep.subr.bf16.mxu0 %v1788
    %2588 = vmatpush1.bf16.msra.mxu0 %v1787
    %2589 = vmatprep.subr.bf16.mxu0 %v1790
    %2590 = vmatpush1.bf16.msra.mxu0 %v1789
    %2591 = vmatprep.subr.bf16.mxu0 %v1792
    %2592 = vmatpush1.bf16.msra.mxu0 %v1791
    %2593 = vmatprep.subr.bf16.mxu0 %v1794
    %2594 = vmatpush1.bf16.msra.mxu0 %v1793
    %2595 = vmatprep.subr.bf16.mxu0 %v1796
    %2596 = vmatpush1.bf16.msra.mxu0 %v1795
    %2597 = vmatprep.subr.bf16.mxu0 %v1798
    %2598 = vmatpush1.bf16.msra.mxu0 %v1797
    %2599 = vmatprep.subr.bf16.mxu0 %v1800
    %2600 = vmatpush1.bf16.msra.mxu0 %v1799
    %2601 = vmatprep.subr.bf16.mxu0 %v1802
    %2602 = vmatpush1.bf16.msra.mxu0 %v1801
    %2603 = vmatprep.subr.bf16.mxu0 %v1804
    %2604 = vmatpush1.bf16.msra.mxu0 %v1803
    %2605 = vmatprep.mubr.bf16.mxu0 %v149
    %2606 = vmatmul.mubr.bf16.gmra.mrb[0].mxu0 %v148
    %v2607 = vpop.f32.mrb[0].mxu0
    %v2608 = vadd.f32 0.0, %v2607
    %v2609 = vpop.f32.mrb[0].mxu0
    %v2610 = vadd.f32 0.0, %v2609
    %v2611 = vpop.f32.mrb[0].mxu0
    %v2612 = vpop.f32.mrb[0].mxu0
    %2613 = vdwg.mxu0
    %2614 = vmatprep.subr.bf16.mxu0 %v1806
    %2615 = vmatpush1.bf16.msra.mxu0 %v1805
    %2616 = vmatprep.subr.bf16.mxu0 %v1808
    %2617 = vmatpush1.bf16.msra.mxu0 %v1807
    %2618 = vmatprep.subr.bf16.mxu0 %v1810
    %2619 = vmatpush1.bf16.msra.mxu0 %v1809
    %2620 = vmatprep.subr.bf16.mxu0 %v1812
    %2621 = vmatpush1.bf16.msra.mxu0 %v1811
    %2622 = vmatprep.subr.bf16.mxu0 %v1814
    %2623 = vmatpush1.bf16.msra.mxu0 %v1813
    %2624 = vmatprep.subr.bf16.mxu0 %v1816
    %2625 = vmatpush1.bf16.msra.mxu0 %v1815
    %2626 = vmatprep.subr.bf16.mxu0 %v1818
    %2627 = vmatpush1.bf16.msra.mxu0 %v1817
    %2628 = vmatprep.subr.bf16.mxu0 %v1820
    %2629 = vmatpush1.bf16.msra.mxu0 %v1819
    %2630 = vmatprep.subr.bf16.mxu0 %v1822
    %2631 = vmatpush1.bf16.msra.mxu0 %v1821
    %2632 = vmatprep.subr.bf16.mxu0 %v1824
    %2633 = vmatpush1.bf16.msra.mxu0 %v1823
    %2634 = vmatprep.subr.bf16.mxu0 %v1826
    %2635 = vmatpush1.bf16.msra.mxu0 %v1825
    %2636 = vmatprep.subr.bf16.mxu0 %v1828
    %2637 = vmatpush1.bf16.msra.mxu0 %v1827
    %2638 = vmatprep.subr.bf16.mxu0 %v1830
    %2639 = vmatpush1.bf16.msra.mxu0 %v1829
    %2640 = vmatprep.subr.bf16.mxu0 %v1832
    %2641 = vmatpush1.bf16.msra.mxu0 %v1831
    %2642 = vmatprep.subr.bf16.mxu0 %v1834
    %2643 = vmatpush1.bf16.msra.mxu0 %v1833
    %2644 = vmatprep.subr.bf16.mxu0 %v1836
    %2645 = vmatpush1.bf16.msra.mxu0 %v1835
    %2646 = vmatprep.mubr.bf16.mxu0 %v151
    %2647 = vmatmul.mubr.bf16.gmra.mrb[0].mxu0 %v150
    %v2648 = vpop.f32.mrb[0].mxu0
    %v2649 = vadd.f32 %v2608, %v2648
    %v2650 = vpop.f32.mrb[0].mxu0
    %v2651 = vadd.f32 %v2610, %v2650
    %v2652 = vpop.f32.mrb[0].mxu0
    %v2653 = vpop.f32.mrb[0].mxu0
    %2654 = vdwg.mxu0
    %2655 = vmatprep.subr.bf16.mxu0 %v1838
    %2656 = vmatpush1.bf16.msra.mxu0 %v1837
    %2657 = vmatprep.subr.bf16.mxu0 %v1840
    %2658 = vmatpush1.bf16.msra.mxu0 %v1839
    %2659 = vmatprep.subr.bf16.mxu0 %v1842
    %2660 = vmatpush1.bf16.msra.mxu0 %v1841
    %2661 = vmatprep.subr.bf16.mxu0 %v1844
    %2662 = vmatpush1.bf16.msra.mxu0 %v1843
    %2663 = vmatprep.subr.bf16.mxu0 %v1846
    %2664 = vmatpush1.bf16.msra.mxu0 %v1845
    %2665 = vmatprep.subr.bf16.mxu0 %v1848
    %2666 = vmatpush1.bf16.msra.mxu0 %v1847
    %2667 = vmatprep.subr.bf16.mxu0 %v1850
    %2668 = vmatpush1.bf16.msra.mxu0 %v1849
    %2669 = vmatprep.subr.bf16.mxu0 %v1852
    %2670 = vmatpush1.bf16.msra.mxu0 %v1851
    %2671 = vmatprep.subr.bf16.mxu0 %v1854
    %2672 = vmatpush1.bf16.msra.mxu0 %v1853
    %2673 = vmatprep.subr.bf16.mxu0 %v1856
    %2674 = vmatpush1.bf16.msra.mxu0 %v1855
    %2675 = vmatprep.subr.bf16.mxu0 %v1858
    %2676 = vmatpush1.bf16.msra.mxu0 %v1857
    %2677 = vmatprep.subr.bf16.mxu0 %v1860
    %2678 = vmatpush1.bf16.msra.mxu0 %v1859
    %2679 = vmatprep.subr.bf16.mxu0 %v1862
    %2680 = vmatpush1.bf16.msra.mxu0 %v1861
    %2681 = vmatprep.subr.bf16.mxu0 %v1864
    %2682 = vmatpush1.bf16.msra.mxu0 %v1863
    %2683 = vmatprep.subr.bf16.mxu0 %v1866
    %2684 = vmatpush1.bf16.msra.mxu0 %v1865
    %2685 = vmatprep.subr.bf16.mxu0 %v1868
    %2686 = vmatpush1.bf16.msra.mxu0 %v1867
    %2687 = vmatprep.mubr.bf16.mxu0 %v153
    %2688 = vmatmul.mubr.bf16.gmra.mrb[0].mxu0 %v152
    %v2689 = vpop.f32.mrb[0].mxu0
    %v2690 = vadd.f32 %v2649, %v2689
    %v2691 = vpop.f32.mrb[0].mxu0
    %v2692 = vadd.f32 %v2651, %v2691
    %v2693 = vpop.f32.mrb[0].mxu0
    %v2694 = vpop.f32.mrb[0].mxu0
    %2695 = vdwg.mxu0
    %2696 = vmatprep.subr.bf16.mxu0 %v1870
    %2697 = vmatpush1.bf16.msra.mxu0 %v1869
    %2698 = vmatprep.subr.bf16.mxu0 %v1872
    %2699 = vmatpush1.bf16.msra.mxu0 %v1871
    %2700 = vmatprep.subr.bf16.mxu0 %v1874
    %2701 = vmatpush1.bf16.msra.mxu0 %v1873
    %2702 = vmatprep.subr.bf16.mxu0 %v1876
    %2703 = vmatpush1.bf16.msra.mxu0 %v1875
    %2704 = vmatprep.subr.bf16.mxu0 %v1878
    %2705 = vmatpush1.bf16.msra.mxu0 %v1877
    %2706 = vmatprep.subr.bf16.mxu0 %v1880
    %2707 = vmatpush1.bf16.msra.mxu0 %v1879
    %2708 = vmatprep.subr.bf16.mxu0 %v1882
    %2709 = vmatpush1.bf16.msra.mxu0 %v1881
    %2710 = vmatprep.subr.bf16.mxu0 %v1884
    %2711 = vmatpush1.bf16.msra.mxu0 %v1883
    %2712 = vmatprep.subr.bf16.mxu0 %v1886
    %2713 = vmatpush1.bf16.msra.mxu0 %v1885
    %2714 = vmatprep.subr.bf16.mxu0 %v1888
    %2715 = vmatpush1.bf16.msra.mxu0 %v1887
    %2716 = vmatprep.subr.bf16.mxu0 %v1890
    %2717 = vmatpush1.bf16.msra.mxu0 %v1889
    %2718 = vmatprep.subr.bf16.mxu0 %v1892
    %2719 = vmatpush1.bf16.msra.mxu0 %v1891
    %2720 = vmatprep.subr.bf16.mxu0 %v1894
    %2721 = vmatpush1.bf16.msra.mxu0 %v1893
    %2722 = vmatprep.subr.bf16.mxu0 %v1896
    %2723 = vmatpush1.bf16.msra.mxu0 %v1895
    %2724 = vmatprep.subr.bf16.mxu0 %v1898
    %2725 = vmatpush1.bf16.msra.mxu0 %v1897
    %2726 = vmatprep.subr.bf16.mxu0 %v1900
    %2727 = vmatpush1.bf16.msra.mxu0 %v1899
    %2728 = vmatprep.mubr.bf16.mxu0 %v155
    %2729 = vmatmul.mubr.bf16.gmra.mrb[0].mxu0 %v154
    %v2730 = vpop.f32.mrb[0].mxu0
    %v2731 = vadd.f32 %v2690, %v2730
    %v2732 = vpop.f32.mrb[0].mxu0
    %v2733 = vadd.f32 %v2692, %v2732
    %v2734 = vpop.f32.mrb[0].mxu0
    %v2735 = vpop.f32.mrb[0].mxu0
    %2736 = vdwg.mxu0
    %2737 = vmatprep.subr.bf16.mxu0 %v1902
    %2738 = vmatpush1.bf16.msra.mxu0 %v1901
    %2739 = vmatprep.subr.bf16.mxu0 %v1904
    %2740 = vmatpush1.bf16.msra.mxu0 %v1903
    %2741 = vmatprep.subr.bf16.mxu0 %v1906
    %2742 = vmatpush1.bf16.msra.mxu0 %v1905
    %2743 = vmatprep.subr.bf16.mxu0 %v1908
    %2744 = vmatpush1.bf16.msra.mxu0 %v1907
    %2745 = vmatprep.subr.bf16.mxu0 %v1910
    %2746 = vmatpush1.bf16.msra.mxu0 %v1909
    %2747 = vmatprep.subr.bf16.mxu0 %v1912
    %2748 = vmatpush1.bf16.msra.mxu0 %v1911
    %2749 = vmatprep.subr.bf16.mxu0 %v1914
    %2750 = vmatpush1.bf16.msra.mxu0 %v1913
    %2751 = vmatprep.subr.bf16.mxu0 %v1916
    %2752 = vmatpush1.bf16.msra.mxu0 %v1915
    %2753 = vmatprep.subr.bf16.mxu0 %v1918
    %2754 = vmatpush1.bf16.msra.mxu0 %v1917
    %2755 = vmatprep.subr.bf16.mxu0 %v1920
    %2756 = vmatpush1.bf16.msra.mxu0 %v1919
    %2757 = vmatprep.subr.bf16.mxu0 %v1922
    %2758 = vmatpush1.bf16.msra.mxu0 %v1921
    %2759 = vmatprep.subr.bf16.mxu0 %v1924
    %2760 = vmatpush1.bf16.msra.mxu0 %v1923
    %2761 = vmatprep.subr.bf16.mxu0 %v1926
    %2762 = vmatpush1.bf16.msra.mxu0 %v1925
    %2763 = vmatprep.subr.bf16.mxu0 %v1928
    %2764 = vmatpush1.bf16.msra.mxu0 %v1927
    %2765 = vmatprep.subr.bf16.mxu0 %v1930
    %2766 = vmatpush1.bf16.msra.mxu0 %v1929
    %2767 = vmatprep.subr.bf16.mxu0 %v1932
    %2768 = vmatpush1.bf16.msra.mxu0 %v1931
    %2769 = vmatprep.mubr.bf16.mxu0 %v157
    %2770 = vmatmul.mubr.bf16.gmra.mrb[0].mxu0 %v156
    %v2771 = vpop.f32.mrb[0].mxu0
    %v2772 = vadd.f32 %v2731, %v2771
    %v2773 = vpop.f32.mrb[0].mxu0
    %v2774 = vadd.f32 %v2733, %v2773
    %v2775 = vpop.f32.mrb[0].mxu0
    %v2776 = vpop.f32.mrb[0].mxu0
    %2777 = vdwg.mxu0
    %2778 = vmatprep.subr.bf16.mxu0 %v1934
    %2779 = vmatpush1.bf16.msra.mxu0 %v1933
    %2780 = vmatprep.subr.bf16.mxu0 %v1936
    %2781 = vmatpush1.bf16.msra.mxu0 %v1935
    %2782 = vmatprep.subr.bf16.mxu0 %v1938
    %2783 = vmatpush1.bf16.msra.mxu0 %v1937
    %2784 = vmatprep.subr.bf16.mxu0 %v1940
    %2785 = vmatpush1.bf16.msra.mxu0 %v1939
    %2786 = vmatprep.subr.bf16.mxu0 %v1942
    %2787 = vmatpush1.bf16.msra.mxu0 %v1941
    %2788 = vmatprep.subr.bf16.mxu0 %v1944
    %2789 = vmatpush1.bf16.msra.mxu0 %v1943
    %2790 = vmatprep.subr.bf16.mxu0 %v1946
    %2791 = vmatpush1.bf16.msra.mxu0 %v1945
    %2792 = vmatprep.subr.bf16.mxu0 %v1948
    %2793 = vmatpush1.bf16.msra.mxu0 %v1947
    %2794 = vmatprep.subr.bf16.mxu0 %v1950
    %2795 = vmatpush1.bf16.msra.mxu0 %v1949
    %2796 = vmatprep.subr.bf16.mxu0 %v1952
    %2797 = vmatpush1.bf16.msra.mxu0 %v1951
    %2798 = vmatprep.subr.bf16.mxu0 %v1954
    %2799 = vmatpush1.bf16.msra.mxu0 %v1953
    %2800 = vmatprep.subr.bf16.mxu0 %v1956
    %2801 = vmatpush1.bf16.msra.mxu0 %v1955
    %2802 = vmatprep.subr.bf16.mxu0 %v1958
    %2803 = vmatpush1.bf16.msra.mxu0 %v1957
    %2804 = vmatprep.subr.bf16.mxu0 %v1960
    %2805 = vmatpush1.bf16.msra.mxu0 %v1959
    %2806 = vmatprep.subr.bf16.mxu0 %v1962
    %2807 = vmatpush1.bf16.msra.mxu0 %v1961
    %2808 = vmatprep.subr.bf16.mxu0 %v1964
    %2809 = vmatpush1.bf16.msra.mxu0 %v1963
    %2810 = vmatprep.mubr.bf16.mxu0 %v159
    %2811 = vmatmul.mubr.bf16.gmra.mrb[0].mxu0 %v158
    %v2812 = vpop.f32.mrb[0].mxu0
    %v2813 = vadd.f32 %v2772, %v2812
    %v2814 = vpop.f32.mrb[0].mxu0
    %v2815 = vadd.f32 %v2774, %v2814
    %v2816 = vpop.f32.mrb[0].mxu0
    %v2817 = vpop.f32.mrb[0].mxu0
    %2818 = vdwg.mxu0
    %2819 = vmatprep.subr.bf16.mxu0 %v1966
    %2820 = vmatpush1.bf16.msra.mxu0 %v1965
    %2821 = vmatprep.subr.bf16.mxu0 %v1968
    %2822 = vmatpush1.bf16.msra.mxu0 %v1967
    %2823 = vmatprep.subr.bf16.mxu0 %v1970
    %2824 = vmatpush1.bf16.msra.mxu0 %v1969
    %2825 = vmatprep.subr.bf16.mxu0 %v1972
    %2826 = vmatpush1.bf16.msra.mxu0 %v1971
    %2827 = vmatprep.subr.bf16.mxu0 %v1974
    %2828 = vmatpush1.bf16.msra.mxu0 %v1973
    %2829 = vmatprep.subr.bf16.mxu0 %v1976
    %2830 = vmatpush1.bf16.msra.mxu0 %v1975
    %2831 = vmatprep.subr.bf16.mxu0 %v1978
    %2832 = vmatpush1.bf16.msra.mxu0 %v1977
    %2833 = vmatprep.subr.bf16.mxu0 %v1980
    %2834 = vmatpush1.bf16.msra.mxu0 %v1979
    %2835 = vmatprep.subr.bf16.mxu0 %v1982
    %2836 = vmatpush1.bf16.msra.mxu0 %v1981
    %2837 = vmatprep.subr.bf16.mxu0 %v1984
    %2838 = vmatpush1.bf16.msra.mxu0 %v1983
    %2839 = vmatprep.subr.bf16.mxu0 %v1986
    %2840 = vmatpush1.bf16.msra.mxu0 %v1985
    %2841 = vmatprep.subr.bf16.mxu0 %v1988
    %2842 = vmatpush1.bf16.msra.mxu0 %v1987
    %2843 = vmatprep.subr.bf16.mxu0 %v1990
    %2844 = vmatpush1.bf16.msra.mxu0 %v1989
    %2845 = vmatprep.subr.bf16.mxu0 %v1992
    %2846 = vmatpush1.bf16.msra.mxu0 %v1991
    %2847 = vmatprep.subr.bf16.mxu0 %v1994
    %2848 = vmatpush1.bf16.msra.mxu0 %v1993
    %2849 = vmatprep.subr.bf16.mxu0 %v1996
    %2850 = vmatpush1.bf16.msra.mxu0 %v1995
    %2851 = vmatprep.mubr.bf16.mxu0 %v161
    %2852 = vmatmul.mubr.bf16.gmra.mrb[0].mxu0 %v160
    %v2853 = vpop.f32.mrb[0].mxu0
    %v2854 = vadd.f32 %v2813, %v2853
    %v2855 = vpop.f32.mrb[0].mxu0
    %v2856 = vadd.f32 %v2815, %v2855
    %v2857 = vpop.f32.mrb[0].mxu0
    %v2858 = vpop.f32.mrb[0].mxu0
    %2859 = vdwg.mxu0
    %2860 = vmatprep.subr.bf16.mxu0 %v1998
    %2861 = vmatpush1.bf16.msra.mxu0 %v1997
    %2862 = vmatprep.subr.bf16.mxu0 %v2000
    %2863 = vmatpush1.bf16.msra.mxu0 %v1999
    %2864 = vmatprep.subr.bf16.mxu0 %v2002
    %2865 = vmatpush1.bf16.msra.mxu0 %v2001
    %2866 = vmatprep.subr.bf16.mxu0 %v2004
    %2867 = vmatpush1.bf16.msra.mxu0 %v2003
    %2868 = vmatprep.subr.bf16.mxu0 %v2006
    %2869 = vmatpush1.bf16.msra.mxu0 %v2005
    %2870 = vmatprep.subr.bf16.mxu0 %v2008
    %2871 = vmatpush1.bf16.msra.mxu0 %v2007
    %2872 = vmatprep.subr.bf16.mxu0 %v2010
    %2873 = vmatpush1.bf16.msra.mxu0 %v2009
    %2874 = vmatprep.subr.bf16.mxu0 %v2012
    %2875 = vmatpush1.bf16.msra.mxu0 %v2011
    %2876 = vmatprep.subr.bf16.mxu0 %v2014
    %2877 = vmatpush1.bf16.msra.mxu0 %v2013
    %2878 = vmatprep.subr.bf16.mxu0 %v2016
    %2879 = vmatpush1.bf16.msra.mxu0 %v2015
    %2880 = vmatprep.subr.bf16.mxu0 %v2018
    %2881 = vmatpush1.bf16.msra.mxu0 %v2017
    %2882 = vmatprep.subr.bf16.mxu0 %v2020
    %2883 = vmatpush1.bf16.msra.mxu0 %v2019
    %2884 = vmatprep.subr.bf16.mxu0 %v2022
    %2885 = vmatpush1.bf16.msra.mxu0 %v2021
    %2886 = vmatprep.subr.bf16.mxu0 %v2024
    %2887 = vmatpush1.bf16.msra.mxu0 %v2023
    %2888 = vmatprep.subr.bf16.mxu0 %v2026
    %2889 = vmatpush1.bf16.msra.mxu0 %v2025
    %2890 = vmatprep.subr.bf16.mxu0 %v2028
    %2891 = vmatpush1.bf16.msra.mxu0 %v2027
    %2892 = vmatprep.mubr.bf16.mxu0 %v163
    %2893 = vmatmul.mubr.bf16.gmra.mrb[0].mxu0 %v162
    %v2894 = vpop.f32.mrb[0].mxu0
    %v2895 = vadd.f32 %v2854, %v2894
    %v2896 = vpop.f32.mrb[0].mxu0
    %v2897 = vadd.f32 %v2856, %v2896
    %v2898 = vpop.f32.mrb[0].mxu0
    %v2899 = vpop.f32.mrb[0].mxu0
    %2900 = vdwg.mxu0
    %2901 = vmatprep.subr.bf16.mxu0 %v2030
    %2902 = vmatpush1.bf16.msra.mxu0 %v2029
    %2903 = vmatprep.subr.bf16.mxu0 %v2032
    %2904 = vmatpush1.bf16.msra.mxu0 %v2031
    %2905 = vmatprep.subr.bf16.mxu0 %v2034
    %2906 = vmatpush1.bf16.msra.mxu0 %v2033
    %2907 = vmatprep.subr.bf16.mxu0 %v2036
    %2908 = vmatpush1.bf16.msra.mxu0 %v2035
    %2909 = vmatprep.subr.bf16.mxu0 %v2038
    %2910 = vmatpush1.bf16.msra.mxu0 %v2037
    %2911 = vmatprep.subr.bf16.mxu0 %v2040
    %2912 = vmatpush1.bf16.msra.mxu0 %v2039
    %2913 = vmatprep.subr.bf16.mxu0 %v2042
    %2914 = vmatpush1.bf16.msra.mxu0 %v2041
    %2915 = vmatprep.subr.bf16.mxu0 %v2044
    %2916 = vmatpush1.bf16.msra.mxu0 %v2043
    %2917 = vmatprep.subr.bf16.mxu0 %v2046
    %2918 = vmatpush1.bf16.msra.mxu0 %v2045
    %2919 = vmatprep.subr.bf16.mxu0 %v2048
    %2920 = vmatpush1.bf16.msra.mxu0 %v2047
    %2921 = vmatprep.subr.bf16.mxu0 %v2050
    %2922 = vmatpush1.bf16.msra.mxu0 %v2049
    %2923 = vmatprep.subr.bf16.mxu0 %v2052
    %2924 = vmatpush1.bf16.msra.mxu0 %v2051
    %2925 = vmatprep.subr.bf16.mxu0 %v2054
    %2926 = vmatpush1.bf16.msra.mxu0 %v2053
    %2927 = vmatprep.subr.bf16.mxu0 %v2056
    %2928 = vmatpush1.bf16.msra.mxu0 %v2055
    %2929 = vmatprep.subr.bf16.mxu0 %v2058
    %2930 = vmatpush1.bf16.msra.mxu0 %v2057
    %2931 = vmatprep.subr.bf16.mxu0 %v2060
    %2932 = vmatpush1.bf16.msra.mxu0 %v2059
    %2933 = vmatprep.mubr.bf16.mxu0 %v165
    %2934 = vmatmul.mubr.bf16.gmra.mrb[0].mxu0 %v164
    %v2935 = vpop.f32.mrb[0].mxu0
    %v2936 = vadd.f32 %v2895, %v2935
    %v2937 = vpop.f32.mrb[0].mxu0
    %v2938 = vadd.f32 %v2897, %v2937
    %v2939 = vpop.f32.mrb[0].mxu0
    %v2940 = vpop.f32.mrb[0].mxu0
    %2941 = vdwg.mxu0
    %2942 = vmatprep.subr.bf16.mxu0 %v2062
    %2943 = vmatpush1.bf16.msra.mxu0 %v2061
    %2944 = vmatprep.subr.bf16.mxu0 %v2064
    %2945 = vmatpush1.bf16.msra.mxu0 %v2063
    %2946 = vmatprep.subr.bf16.mxu0 %v2066
    %2947 = vmatpush1.bf16.msra.mxu0 %v2065
    %2948 = vmatprep.subr.bf16.mxu0 %v2068
    %2949 = vmatpush1.bf16.msra.mxu0 %v2067
    %2950 = vmatprep.subr.bf16.mxu0 %v2070
    %2951 = vmatpush1.bf16.msra.mxu0 %v2069
    %2952 = vmatprep.subr.bf16.mxu0 %v2072
    %2953 = vmatpush1.bf16.msra.mxu0 %v2071
    %2954 = vmatprep.subr.bf16.mxu0 %v2074
    %2955 = vmatpush1.bf16.msra.mxu0 %v2073
    %2956 = vmatprep.subr.bf16.mxu0 %v2076
    %2957 = vmatpush1.bf16.msra.mxu0 %v2075
    %2958 = vmatprep.subr.bf16.mxu0 %v2078
    %2959 = vmatpush1.bf16.msra.mxu0 %v2077
    %2960 = vmatprep.subr.bf16.mxu0 %v2080
    %2961 = vmatpush1.bf16.msra.mxu0 %v2079
    %2962 = vmatprep.subr.bf16.mxu0 %v2082
    %2963 = vmatpush1.bf16.msra.mxu0 %v2081
    %2964 = vmatprep.subr.bf16.mxu0 %v2084
    %2965 = vmatpush1.bf16.msra.mxu0 %v2083
    %2966 = vmatprep.subr.bf16.mxu0 %v2086
    %2967 = vmatpush1.bf16.msra.mxu0 %v2085
    %2968 = vmatprep.subr.bf16.mxu0 %v2088
    %2969 = vmatpush1.bf16.msra.mxu0 %v2087
    %2970 = vmatprep.subr.bf16.mxu0 %v2090
    %2971 = vmatpush1.bf16.msra.mxu0 %v2089
    %2972 = vmatprep.subr.bf16.mxu0 %v2092
    %2973 = vmatpush1.bf16.msra.mxu0 %v2091
    %2974 = vmatprep.mubr.bf16.mxu0 %v167
    %2975 = vmatmul.mubr.bf16.gmra.mrb[0].mxu0 %v166
    %v2976 = vpop.f32.mrb[0].mxu0
    %v2977 = vadd.f32 %v2936, %v2976
    %v2978 = vpop.f32.mrb[0].mxu0
    %v2979 = vadd.f32 %v2938, %v2978
    %v2980 = vpop.f32.mrb[0].mxu0
    %v2981 = vpop.f32.mrb[0].mxu0
    %2982 = vdwg.mxu0
    %2983 = vmatprep.subr.bf16.mxu0 %v2094
    %2984 = vmatpush1.bf16.msra.mxu0 %v2093
    %2985 = vmatprep.subr.bf16.mxu0 %v2096
    %2986 = vmatpush1.bf16.msra.mxu0 %v2095
    %2987 = vmatprep.subr.bf16.mxu0 %v2098
    %2988 = vmatpush1.bf16.msra.mxu0 %v2097
    %2989 = vmatprep.subr.bf16.mxu0 %v2100
    %2990 = vmatpush1.bf16.msra.mxu0 %v2099
    %2991 = vmatprep.subr.bf16.mxu0 %v2102
    %2992 = vmatpush1.bf16.msra.mxu0 %v2101
    %2993 = vmatprep.subr.bf16.mxu0 %v2104
    %2994 = vmatpush1.bf16.msra.mxu0 %v2103
    %2995 = vmatprep.subr.bf16.mxu0 %v2106
    %2996 = vmatpush1.bf16.msra.mxu0 %v2105
    %2997 = vmatprep.subr.bf16.mxu0 %v2108
    %2998 = vmatpush1.bf16.msra.mxu0 %v2107
    %2999 = vmatprep.subr.bf16.mxu0 %v2110
    %3000 = vmatpush1.bf16.msra.mxu0 %v2109
    %3001 = vmatprep.subr.bf16.mxu0 %v2112
    %3002 = vmatpush1.bf16.msra.mxu0 %v2111
    %3003 = vmatprep.subr.bf16.mxu0 %v2114
    %3004 = vmatpush1.bf16.msra.mxu0 %v2113
    %3005 = vmatprep.subr.bf16.mxu0 %v2116
    %3006 = vmatpush1.bf16.msra.mxu0 %v2115
    %3007 = vmatprep.subr.bf16.mxu0 %v2118
    %3008 = vmatpush1.bf16.msra.mxu0 %v2117
    %3009 = vmatprep.subr.bf16.mxu0 %v2120
    %3010 = vmatpush1.bf16.msra.mxu0 %v2119
    %3011 = vmatprep.subr.bf16.mxu0 %v2122
    %3012 = vmatpush1.bf16.msra.mxu0 %v2121
    %3013 = vmatprep.subr.bf16.mxu0 %v2124
    %3014 = vmatpush1.bf16.msra.mxu0 %v2123
    %3015 = vmatprep.mubr.bf16.mxu0 %v169
    %3016 = vmatmul.mubr.bf16.gmra.mrb[0].mxu0 %v168
    %v3017 = vpop.f32.mrb[0].mxu0
    %v3018 = vadd.f32 %v2977, %v3017
    %v3019 = vpop.f32.mrb[0].mxu0
    %v3020 = vadd.f32 %v2979, %v3019
    %v3021 = vpop.f32.mrb[0].mxu0
    %v3022 = vpop.f32.mrb[0].mxu0
    %3023 = vdwg.mxu0
    %3024 = vmatprep.subr.bf16.mxu0 %v2126
    %3025 = vmatpush1.bf16.msra.mxu0 %v2125
    %3026 = vmatprep.subr.bf16.mxu0 %v2128
    %3027 = vmatpush1.bf16.msra.mxu0 %v2127
    %3028 = vmatprep.subr.bf16.mxu0 %v2130
    %3029 = vmatpush1.bf16.msra.mxu0 %v2129
    %3030 = vmatprep.subr.bf16.mxu0 %v2132
    %3031 = vmatpush1.bf16.msra.mxu0 %v2131
    %3032 = vmatprep.subr.bf16.mxu0 %v2134
    %3033 = vmatpush1.bf16.msra.mxu0 %v2133
    %3034 = vmatprep.subr.bf16.mxu0 %v2136
    %3035 = vmatpush1.bf16.msra.mxu0 %v2135
    %3036 = vmatprep.subr.bf16.mxu0 %v2138
    %3037 = vmatpush1.bf16.msra.mxu0 %v2137
    %3038 = vmatprep.subr.bf16.mxu0 %v2140
    %3039 = vmatpush1.bf16.msra.mxu0 %v2139
    %3040 = vmatprep.subr.bf16.mxu0 %v2142
    %3041 = vmatpush1.bf16.msra.mxu0 %v2141
    %3042 = vmatprep.subr.bf16.mxu0 %v2144
    %3043 = vmatpush1.bf16.msra.mxu0 %v2143
    %3044 = vmatprep.subr.bf16.mxu0 %v2146
    %3045 = vmatpush1.bf16.msra.mxu0 %v2145
    %3046 = vmatprep.subr.bf16.mxu0 %v2148
    %3047 = vmatpush1.bf16.msra.mxu0 %v2147
    %3048 = vmatprep.subr.bf16.mxu0 %v2150
    %3049 = vmatpush1.bf16.msra.mxu0 %v2149
    %3050 = vmatprep.subr.bf16.mxu0 %v2152
    %3051 = vmatpush1.bf16.msra.mxu0 %v2151
    %3052 = vmatprep.subr.bf16.mxu0 %v2154
    %3053 = vmatpush1.bf16.msra.mxu0 %v2153
    %3054 = vmatprep.subr.bf16.mxu0 %v2156
    %3055 = vmatpush1.bf16.msra.mxu0 %v2155
    %3056 = vmatprep.mubr.bf16.mxu0 %v171
    %3057 = vmatmul.mubr.bf16.gmra.mrb[0].mxu0 %v170
    %v3058 = vpop.f32.mrb[0].mxu0
    %v3059 = vadd.f32 %v3018, %v3058
    %v3060 = vpop.f32.mrb[0].mxu0
    %v3061 = vadd.f32 %v3020, %v3060
    %v3062 = vpop.f32.mrb[0].mxu0
    %v3063 = vpop.f32.mrb[0].mxu0
    %3064 = vdwg.mxu0
    %3065 = vmatprep.subr.bf16.mxu0 %v2158
    %3066 = vmatpush1.bf16.msra.mxu0 %v2157
    %3067 = vmatprep.subr.bf16.mxu0 %v2160
    %3068 = vmatpush1.bf16.msra.mxu0 %v2159
    %3069 = vmatprep.subr.bf16.mxu0 %v2162
    %3070 = vmatpush1.bf16.msra.mxu0 %v2161
    %3071 = vmatprep.subr.bf16.mxu0 %v2164
    %3072 = vmatpush1.bf16.msra.mxu0 %v2163
    %3073 = vmatprep.subr.bf16.mxu0 %v2166
    %3074 = vmatpush1.bf16.msra.mxu0 %v2165
    %3075 = vmatprep.subr.bf16.mxu0 %v2168
    %3076 = vmatpush1.bf16.msra.mxu0 %v2167
    %3077 = vmatprep.subr.bf16.mxu0 %v2170
    %3078 = vmatpush1.bf16.msra.mxu0 %v2169
    %3079 = vmatprep.subr.bf16.mxu0 %v2172
    %3080 = vmatpush1.bf16.msra.mxu0 %v2171
    %3081 = vmatprep.subr.bf16.mxu0 0
    %3082 = vmatpush1.bf16.msra.mxu0 0
    %3083 = vmatprep.subr.bf16.mxu0 0
    %3084 = vmatpush1.bf16.msra.mxu0 0
    %3085 = vmatprep.subr.bf16.mxu0 0
    %3086 = vmatpush1.bf16.msra.mxu0 0
    %3087 = vmatprep.subr.bf16.mxu0 0
    %3088 = vmatpush1.bf16.msra.mxu0 0
    %3089 = vmatprep.subr.bf16.mxu0 0
    %3090 = vmatpush1.bf16.msra.mxu0 0
    %3091 = vmatprep.subr.bf16.mxu0 0
    %3092 = vmatpush1.bf16.msra.mxu0 0
    %3093 = vmatprep.subr.bf16.mxu0 0
    %3094 = vmatpush1.bf16.msra.mxu0 0
    %3095 = vmatprep.subr.bf16.mxu0 0
    %3096 = vmatpush1.bf16.msra.mxu0 0
    %3097 = vmatprep.mubr.bf16.mxu0 0
    %3098 = vmatmul.mubr.bf16.gmra.mrb[0].mxu0 %v172
    %v3099 = vpop.f32.mrb[0].mxu0
    %v3100 = vadd.f32 %v3059, %v3099
    %v3101 = vpop.f32.mrb[0].mxu0
    %v3102 = vadd.f32 %v3061, %v3101
    %v3103 = vpop.f32.mrb[0].mxu0
    %v3104 = vpop.f32.mrb[0].mxu0
    %3105 = vdwg.mxu0
    %vm3106 = vcmask 1043456
    %v3107 = vsel %vm3106, %v3100, 0.0
    %v3108 = vrot.slane %v3107, 4
    %v3109 = vadd.f32 %v3107, %v3108
    %v3110 = vrot.slane %v3109, 2
    %v3111 = vadd.f32 %v3109, %v3110
    %v3112 = vrot.slane %v3111, 1
    %v3113 = vadd.f32 %v3111, %v3112
    %v3114 = vsel %vm3106, %v3102, 0.0
    %v3115 = vrot.slane %v3114, 4
    %v3116 = vadd.f32 %v3114, %v3115
    %v3117 = vrot.slane %v3116, 2
    %v3118 = vadd.f32 %v3116, %v3117
    %v3119 = vrot.slane %v3118, 1
    %v3120 = vadd.f32 %v3118, %v3119
    %v3121 = vrcp.pop 4.0
    %v3122 = vmul.f32 %v3113, %v3121
    %v3123 = vmul.f32 %v3120, %v3121
    %v3124 = vsub.f32 %v3100, %v3122
    %v3125 = vsub.f32 %v3102, %v3123
    %v3126 = vmul.f32 %v3124, %v3124
    %v3127 = vmul.f32 %v3125, %v3125
    %v3128 = vsel %vm3106, %v3126, 0.0
    %v3129 = vrot.slane %v3128, 4
    %v3130 = vadd.f32 %v3128, %v3129
    %v3131 = vrot.slane %v3130, 2
    %v3132 = vadd.f32 %v3130, %v3131
    %v3133 = vrot.slane %v3132, 1
    %v3134 = vadd.f32 %v3132, %v3133
    %v3135 = vsel %vm3106, %v3127, 0.0
    %v3136 = vrot.slane %v3135, 4
    %v3137 = vadd.f32 %v3135, %v3136
    %v3138 = vrot.slane %v3137, 2
    %v3139 = vadd.f32 %v3137, %v3138
    %v3140 = vrot.slane %v3139, 1
    %v3141 = vadd.f32 %v3139, %v3140
    %v3142 = vmul.f32 %v3134, %v3121
    %v3143 = vmul.f32 %v3141, %v3121
    %v3144 = vld [vmem:[#allocation7] sm:$0x3]
    %v3145 = vadd.f32 %v3142, 1e-05
    %v3146 = vadd.f32 %v3143, 1e-05
    %v3147 = vrsqrt.pop %v3145
    %v3148 = vrsqrt.pop %v3146
    %v3151 = vcombine.low %v3147, %v3148
    %v3153 = vunpack.c.l.s4 1966171168
    %v3154 = vunpack.c.0.s8 %v3153
    %v3155 = vlaneseq
    %v3156 = vshrl.u32 %v3155, 7
    %v3157 = vsub.s32 %v3154, %v3156
    %v3158 = vrot.slane %v3151, %v3157
    %v3160 = vunpack.c.l.s4 1966171168
    %v3161 = vunpack.c.0.s8 %v3160
    %v3162 = vlaneseq
    %v3163 = vshrl.u32 %v3162, 7
    %v3164 = vsub.s32 %v3161, %v3163
    %v3165 = vrot.slane %v3158, %v3164
    %v3167 = vmul.f32 %v3144, %v3165
    %v3168 = vld [vmem:[#allocation8] sm:$0x3]
    %v3170 = vlaneseq
    %v3171 = vshrl.u32 %v3170, 7
    %v3172 = vsub.s32 0, %v3171
    %v3173 = vrot.slane %v3167, %v3172
    %v3174 = vlaneseq
    %v3175 = vshrl.u32 %v3174, 7
    %v3176 = vsub.s32 1, %v3175
    %v3177 = vrot.slane %v3167, %v3176
    %v3180 = vmul.f32 %v3122, %v3173
    %v3181 = vmul.f32 %v3123, %v3177
    %v3184 = vcombine.low %v3180, %v3181
    %v3186 = vunpack.c.l.s4 1966171168
    %v3187 = vunpack.c.0.s8 %v3186
    %v3188 = vlaneseq
    %v3189 = vshrl.u32 %v3188, 7
    %v3190 = vsub.s32 %v3187, %v3189
    %v3191 = vrot.slane %v3184, %v3190
    %v3193 = vunpack.c.l.s4 1966171168
    %v3194 = vunpack.c.0.s8 %v3193
    %v3195 = vlaneseq
    %v3196 = vshrl.u32 %v3195, 7
    %v3197 = vsub.s32 %v3194, %v3196
    %v3198 = vrot.slane %v3191, %v3197
    %v3200 = vsub.f32 %v3168, %v3198
    %v3201 = vmul.f32 %v3100, %v3173
    %v3202 = vmul.f32 %v3102, %v3177
    %v3204 = vlaneseq
    %v3205 = vshrl.u32 %v3204, 7
    %v3206 = vsub.s32 0, %v3205
    %v3207 = vrot.slane %v3200, %v3206
    %v3208 = vlaneseq
    %v3209 = vshrl.u32 %v3208, 7
    %v3210 = vsub.s32 1, %v3209
    %v3211 = vrot.slane %v3200, %v3210
    %v3214 = vadd.f32 %v3201, %v3207
    %v3215 = vadd.f32 %v3202, %v3211
    %v3216 = vmax.f32 %v3214, 0.0
    %v3217 = vmax.f32 %v3215, 0.0
    %v3218 = vpack.c.bf16 %v3216, %v3216
    %v3219 = vpack.c.bf16 %v3217, %v3217
    %v3220 = vld [vmem:[#allocation10] sm:$0xf]
    %v3221 = vld [vmem:[#allocation10 + $0x4] sm:$0xf]
    %v3222 = vld [vmem:[#allocation10 + $0x8] sm:$0xf]
    %v3223 = vld [vmem:[#allocation10 + $0xc] sm:$0xf]
    %v3224 = vld [vmem:[#allocation10 + $0x10] sm:$0xf]
    %v3225 = vld [vmem:[#allocation10 + $0x14] sm:$0xf]
    %v3226 = vld [vmem:[#allocation10 + $0x18] sm:$0xf]
    %v3227 = vld [vmem:[#allocation10 + $0x1c] sm:$0xf]
    %v3228 = vld [vmem:[#allocation10 + $0x20] sm:$0xf]
    %v3229 = vld [vmem:[#allocation10 + $0x24] sm:$0xf]
    %v3230 = vld [vmem:[#allocation10 + $0x28] sm:$0xf]
    %v3231 = vld [vmem:[#allocation10 + $0x2c] sm:$0xf]
    %v3232 = vld [vmem:[#allocation10 + $0x30] sm:$0xf]
    %v3233 = vld [vmem:[#allocation10 + $0x34] sm:$0xf]
    %v3234 = vld [vmem:[#allocation10 + $0x38] sm:$0xf]
    %v3235 = vld [vmem:[#allocation10 + $0x3c] sm:$0xf]
    %v3236 = vld [vmem:[#allocation10 + $0x40] sm:$0xf]
    %v3237 = vld [vmem:[#allocation10 + $0x44] sm:$0xf]
    %v3238 = vld [vmem:[#allocation10 + $0x48] sm:$0xf]
    %v3239 = vld [vmem:[#allocation10 + $0x4c] sm:$0xf]
    %v3240 = vld [vmem:[#allocation10 + $0x50] sm:$0xf]
    %v3241 = vld [vmem:[#allocation10 + $0x54] sm:$0xf]
    %v3242 = vld [vmem:[#allocation10 + $0x58] sm:$0xf]
    %v3243 = vld [vmem:[#allocation10 + $0x5c] sm:$0xf]
    %v3244 = vld [vmem:[#allocation10 + $0x60] sm:$0xf]
    %v3245 = vld [vmem:[#allocation10 + $0x64] sm:$0xf]
    %v3246 = vld [vmem:[#allocation10 + $0x68] sm:$0xf]
    %v3247 = vld [vmem:[#allocation10 + $0x6c] sm:$0xf]
    %v3248 = vld [vmem:[#allocation10 + $0x70] sm:$0xf]
    %v3249 = vld [vmem:[#allocation10 + $0x74] sm:$0xf]
    %v3250 = vld [vmem:[#allocation10 + $0x78] sm:$0xf]
    %v3251 = vld [vmem:[#allocation10 + $0x7c] sm:$0xf]
    %v3252 = vld [vmem:[#allocation11] sm:$0x1]
    %v3254 = vlaneseq
    %v3255 = vshrl.u32 %v3254, 7
    %v3256 = vsub.s32 0, %v3255
    %v3257 = vrot.slane %v3252, %v3256
    %v3291 = vunpack.c.l.b16 %v3220
    %v3292 = vunpack.c.l.b16 %v3221
    %v3293 = vunpack.c.l.b16 %v3222
    %v3294 = vunpack.c.l.b16 %v3223
    %v3295 = vunpack.c.l.b16 %v3224
    %v3296 = vunpack.c.l.b16 %v3225
    %v3297 = vunpack.c.l.b16 %v3226
    %v3298 = vunpack.c.l.b16 %v3227
    %v3299 = vunpack.c.l.b16 %v3228
    %v3300 = vunpack.c.l.b16 %v3229
    %v3301 = vunpack.c.l.b16 %v3230
    %v3302 = vunpack.c.l.b16 %v3231
    %v3303 = vunpack.c.l.b16 %v3232
    %v3304 = vunpack.c.l.b16 %v3233
    %v3305 = vunpack.c.l.b16 %v3234
    %v3306 = vunpack.c.l.b16 %v3235
    %v3307 = vunpack.c.l.b16 %v3236
    %v3308 = vunpack.c.l.b16 %v3237
    %v3309 = vunpack.c.l.b16 %v3238
    %v3310 = vunpack.c.l.b16 %v3239
    %v3311 = vunpack.c.l.b16 %v3240
    %v3312 = vunpack.c.l.b16 %v3241
    %v3313 = vunpack.c.l.b16 %v3242
    %v3314 = vunpack.c.l.b16 %v3243
    %v3315 = vunpack.c.l.b16 %v3244
    %v3316 = vunpack.c.l.b16 %v3245
    %v3317 = vunpack.c.l.b16 %v3246
    %v3318 = vunpack.c.l.b16 %v3247
    %v3319 = vunpack.c.l.b16 %v3248
    %v3320 = vunpack.c.l.b16 %v3249
    %v3321 = vunpack.c.l.b16 %v3250
    %v3322 = vunpack.c.l.b16 %v3251
    %v3323 = vpack.c.b16 %v3292, %v3291
    %v3324 = vpack.c.b16 %v3294, %v3293
    %v3325 = vpack.c.b16 %v3296, %v3295
    %v3326 = vpack.c.b16 %v3298, %v3297
    %v3327 = vpack.c.b16 %v3300, %v3299
    %v3328 = vpack.c.b16 %v3302, %v3301
    %v3329 = vpack.c.b16 %v3304, %v3303
    %v3330 = vpack.c.b16 %v3306, %v3305
    %v3331 = vpack.c.b16 %v3308, %v3307
    %v3332 = vpack.c.b16 %v3310, %v3309
    %v3333 = vpack.c.b16 %v3312, %v3311
    %v3334 = vpack.c.b16 %v3314, %v3313
    %v3335 = vpack.c.b16 %v3316, %v3315
    %v3336 = vpack.c.b16 %v3318, %v3317
    %v3337 = vpack.c.b16 %v3320, %v3319
    %v3338 = vpack.c.b16 %v3322, %v3321
    %3355 = vmatprep.subr.bf16.mxu0 0
    %3356 = vmatpush1.bf16.msra.mxu0 %v3323
    %3357 = vmatprep.subr.bf16.mxu0 0
    %3358 = vmatpush1.bf16.msra.mxu0 %v3324
    %3359 = vmatprep.subr.bf16.mxu0 0
    %3360 = vmatpush1.bf16.msra.mxu0 %v3325
    %3361 = vmatprep.subr.bf16.mxu0 0
    %3362 = vmatpush1.bf16.msra.mxu0 %v3326
    %3363 = vmatprep.subr.bf16.mxu0 0
    %3364 = vmatpush1.bf16.msra.mxu0 %v3327
    %3365 = vmatprep.subr.bf16.mxu0 0
    %3366 = vmatpush1.bf16.msra.mxu0 %v3328
    %3367 = vmatprep.subr.bf16.mxu0 0
    %3368 = vmatpush1.bf16.msra.mxu0 %v3329
    %3369 = vmatprep.subr.bf16.mxu0 0
    %3370 = vmatpush1.bf16.msra.mxu0 %v3330
    %3371 = vmatprep.subr.bf16.mxu0 0
    %3372 = vmatpush1.bf16.msra.mxu0 %v3331
    %3373 = vmatprep.subr.bf16.mxu0 0
    %3374 = vmatpush1.bf16.msra.mxu0 %v3332
    %3375 = vmatprep.subr.bf16.mxu0 0
    %3376 = vmatpush1.bf16.msra.mxu0 %v3333
    %3377 = vmatprep.subr.bf16.mxu0 0
    %3378 = vmatpush1.bf16.msra.mxu0 %v3334
    %3379 = vmatprep.subr.bf16.mxu0 0
    %3380 = vmatpush1.bf16.msra.mxu0 %v3335
    %3381 = vmatprep.subr.bf16.mxu0 0
    %3382 = vmatpush1.bf16.msra.mxu0 %v3336
    %3383 = vmatprep.subr.bf16.mxu0 0
    %3384 = vmatpush1.bf16.msra.mxu0 %v3337
    %3385 = vmatprep.subr.bf16.mxu0 0
    %3386 = vmatpush1.bf16.msra.mxu0 %v3338
    %3387 = vmatprep.mubr.bf16.mxu0 %v3219
    %3388 = vmatmul.mubr.bf16.gmra.mrb[0].mxu0 %v3218
    %v3389 = vpop.f32.mrb[0].mxu0
    %v3390 = vadd.f32 %v3257, %v3389
    %v3391 = vpop.f32.mrb[0].mxu0
    %v3392 = vpop.f32.mrb[0].mxu0
    %v3393 = vpop.f32.mrb[0].mxu0
    %3394 = vdwg.mxu0
    %3395 = vst [vmem:[#allocation13] sm:$0xf] %v3390
    // Predicated region
    $region50: #{tpu_custom_call.1} parent=1 // pred_check
      _
    $region51: #{tpu_custom_call.1} parent=1 // pred_check_branch
      %3397 = sbr.rel (0) target = $region53
    $region52: #{tpu_custom_call.1} parent=1 // pred_region
      %s3399 = ssub.s32 64, 64
      %3400 = vsyncadd [#allocation4], %s3399
      %s3402 = sshll.u32 [#allocation13], 4
      %s3403 = int_to_ptr.vmem [resolvable:$true] %s3402
      %3405 = dma.vmem_to_hbm [thread:$0]  %s3403, 64, %s6, [#allocation4]
    $region53: #{tpu_custom_call.1} parent=1 // pred_fallthru
      _
    // Predicated region
    $region54: #{tpu_custom_call.1} parent=1 // pred_check
      _
    $region55: #{tpu_custom_call.1} parent=1 // pred_check_branch
      %3407 = sbr.rel (0) target = $region57
    $region56: #{tpu_custom_call.1} parent=1 // pred_region
      %3408 = dma.done [#allocation4], 64
    $region57: #{tpu_custom_call.1} parent=1 // pred_fallthru
      _
    %3409 = vsyncpa [#allocation3], 1
    %3410 = vsyncpa [#allocation6], 1
    %3411 = vsyncpa [#allocation9], 1
    %3412 = vsyncpa [#allocation12], 1
    %3413 = vsyncpa [#allocation4], 1

</llo_original>
